<compile_context>
chip_gen: v5e
topology: v5e:2x2
jax: 0.10.0
libtpu: 0.0.40
codegen_flags: <defaults>
</compile_context>

<pallas_src>
import functools

import jax
import jax.numpy as jnp
from jax.experimental import pallas as pl
from jax.experimental.pallas import tpu as pltpu


def _round_up(x, m):
    return ((x + m - 1) // m) * m


# --------------------------------------------------------------------------
# Kernel
# --------------------------------------------------------------------------
def _gru_update_kernel(m_ref, h_ref, wi_ref, wh_ref, bi_ref, bhn_ref, out_ref,
                       *, hidden, hidden_padded):
    """One row-tile of the single-step GRU update (the MPNN node update)."""
    H, Hp = hidden, hidden_padded

    hv = h_ref[...]                                   # single load of h tile
    h32 = hv.astype(jnp.float32)                      # (TM, H) f32 for blend
    h_b = hv.astype(jnp.bfloat16)                     # (TM, H) bf16 for MXU
    x_b = m_ref[...].astype(jnp.bfloat16)             # (TM, K) bf16 for MXU

    # Two fused MXU matmuls (bf16 operands, f32 accumulation).
    # Gate columns are padded per-gate to Hp (multiple of 128) at pack time so
    # every gate slice below starts on a lane-aligned (vreg) boundary.
    gi = jnp.dot(x_b, wi_ref[...], preferred_element_type=jnp.float32)
    gi = gi + bi_ref[...]                             # (TM, 3*Hp): [r | z | n]
    gh = jnp.dot(h_b, wh_ref[...], preferred_element_type=jnp.float32)

    # Slice each gate to its real width H immediately so only (TM, H) values
    # stay live (reduces f32 temporary pressure vs. keeping full 3*Hp slabs).
    r = jax.nn.sigmoid(gi[:, 0:H] + gh[:, 0:H])
    z = jax.nn.sigmoid(gi[:, Hp:Hp + H] + gh[:, Hp:Hp + H])
    n = jnp.tanh(gi[:, 2 * Hp:2 * Hp + H]
                 + r * (gh[:, 2 * Hp:2 * Hp + H] + bhn_ref[:, 0:H]))

    # (1 - z) * n + z * h  ==  n + z * (h - n)
    out_ref[...] = (n + z * (h32 - n)).astype(out_ref.dtype)


# --------------------------------------------------------------------------
# Tiling / VMEM sizing (generation-aware)
# --------------------------------------------------------------------------
def _vmem_bytes_estimate(tm, in_m, hidden, hidden_padded,
                         m_isz, h_isz, out_isz, single_buffer_weights):
    wbuf = 1 if single_buffer_weights else 2
    weights = wbuf * ((in_m + hidden) * 3 * hidden_padded * 2      # bf16 fused W
                      + 4 * hidden_padded * 4)                     # f32 biases
    acts_in = 2 * tm * (in_m * m_isz + hidden * h_isz)             # dbl-buffered in
    acts_out = 2 * tm * hidden * out_isz                           # dbl-buffered out
    gates = 2 * tm * 3 * hidden_padded * 4                         # gi/gh f32
    elementwise = 6 * tm * hidden_padded * 4                       # r/z/n/h32 slack
    return weights + acts_in + acts_out + gates + elementwise


def _pick_tile_and_vmem(bn, in_m, hidden, hidden_padded,
                        m_isz, h_isz, out_isz, tm_req):
    try:
        vmem_cap = int(pltpu.get_tpu_info().vmem_capacity_bytes)
    except Exception:
        vmem_cap = 64 * 1024 * 1024   # conservative (v7x per-TC VMEM)

    # Keep at least ~4 grid steps so DMA/compute pipeline and v7x's two
    # TensorCores (parallel axis) always have work, instead of one giant tile.
    tm_cap = max(8, _round_up(pl.cdiv(bn, 4), 8))
    tm_eff = max(8, (min(tm_req, tm_cap) // 8) * 8)

    est = lambda t: _vmem_bytes_estimate(t, in_m, hidden, hidden_padded,
                                         m_isz, h_isz, out_isz, True)
    while tm_eff > 8 and est(tm_eff) > int(0.7 * vmem_cap):
        tm_eff = max(8, ((tm_eff // 2) // 8) * 8)
    # TODO(synk): for very large Hp (>~1.5-2K) additionally column-tile the 3H
    # gate axis with a second ("arbitrary") grid dimension.

    vmem_limit = int(min(int(0.9 * vmem_cap),
                         max(32 * 1024 * 1024, int(1.5 * est(tm_eff)))))
    return tm_eff, vmem_limit


# --------------------------------------------------------------------------
# Pallas call wrapper
# --------------------------------------------------------------------------
@functools.partial(jax.jit,
                   static_argnames=("tm_eff", "vmem_limit",
                                    "single_buffer_weights"))
def _mpnn_update_packed(h_v, m_v, wi, wh, bi, bhn, *, tm_eff, vmem_limit,
                        single_buffer_weights):
    B, N, H = h_v.shape
    IN_M = m_v.shape[2]
    BN = B * N
    Hp = wi.shape[1] // 3

    # Reshape only (no padding, no casts): zero extra HBM traffic.
    m2 = m_v.reshape(BN, IN_M)
    h2 = h_v.reshape(BN, H)

    grid = (pl.cdiv(BN, tm_eff),)   # partial last row-tile handled by masking

    row_spec = lambda feat: pl.BlockSpec((tm_eff, feat), lambda i: (i, 0))
    if single_buffer_weights:
        # Grid-invariant blocks: DMA'd once, revisited every step; a single
        # VMEM buffer is enough (default double-buffering is pure waste).
        res_spec = lambda r_, c_: pl.BlockSpec(
            (r_, c_), lambda i: (0, 0), pipeline_mode=pl.Buffered(1))
    else:
        res_spec = lambda r_, c_: pl.BlockSpec((r_, c_), lambda i: (0, 0))

    cost = pl.CostEstimate(
        flops=2 * BN * (IN_M + H) * 3 * Hp + 12 * BN * H,
        transcendentals=3 * BN * H,
        bytes_accessed=(BN * IN_M * m_v.dtype.itemsize        # m in
                        + BN * H * h_v.dtype.itemsize         # h in
                        + BN * H * h_v.dtype.itemsize         # h' out
                        + (IN_M + H) * 3 * Hp * wi.dtype.itemsize
                        + 4 * Hp * 4),                         # biases
    )

    out2 = pl.pallas_call(
        functools.partial(_gru_update_kernel, hidden=H, hidden_padded=Hp),
        out_shape=jax.ShapeDtypeStruct((BN, H), h_v.dtype),
        grid_spec=pltpu.PrefetchScalarGridSpec(
            num_scalar_prefetch=0,
            grid=grid,
            in_specs=[
                row_spec(IN_M),           # m_v row tile
                row_spec(H),              # h_v row tile
                res_spec(IN_M, 3 * Hp),   # fused input->hidden weights (bf16)
                res_spec(H, 3 * Hp),      # fused hidden->hidden weights (bf16)
                res_spec(1, 3 * Hp),      # fused biases [b_r | b_z | b_in]
                res_spec(1, Hp),          # b_hn
            ],
            out_specs=pl.BlockSpec((tm_eff, H), lambda i: (i, 0)),
        ),
        compiler_params=pltpu.CompilerParams(
            dimension_semantics=("parallel",),
            vmem_limit_bytes=vmem_limit,
        ),
        cost_estimate=cost,
    )(m2, h2, wi, wh, bi, bhn)

    return out2.reshape(B, N, H)


def mpnn_update(h_v, m_v, packed_params, *, tm=512):
    """UpdateFunction('mpnn').forward(h_v, m_v) with pre-packed GRU weights.

    h_v: (B, N, H) node hidden states.
    m_v: (B, N, IN_M) aggregated messages.
    packed_params: output of pack_mpnn_params().
    Returns (B, N, H) in h_v.dtype.
    """
    wi, wh, bi, bhn = packed_params
    B, N, H = h_v.shape
    IN_M = m_v.shape[2]
    Hp = wi.shape[1] // 3
    BN = B * N

    tm_eff, vmem_limit = _pick_tile_and_vmem(
        BN, IN_M, H, Hp,
        jnp.dtype(m_v.dtype).itemsize, jnp.dtype(h_v.dtype).itemsize,
        jnp.dtype(h_v.dtype).itemsize, tm)

    try:
        return _mpnn_update_packed(h_v, m_v, wi, wh, bi, bhn,
                                   tm_eff=tm_eff, vmem_limit=vmem_limit,
                                   single_buffer_weights=True)
    except Exception:
        # Fallback for JAX versions that reject single-buffered resident blocks.
        return _mpnn_update_packed(h_v, m_v, wi, wh, bi, bhn,
                                   tm_eff=tm_eff, vmem_limit=vmem_limit,
                                   single_buffer_weights=False)


# --------------------------------------------------------------------------
# One-time parameter packing (done outside the per-call path)
# --------------------------------------------------------------------------
def pack_mpnn_params(params, weight_dtype=jnp.bfloat16):
    """Fuse + pad the GRU gate weights once; pass the result to mpnn_update.

    Gate order (r, z, n) matches PyTorch nn.GRU.  Only the gate/output axis is
    padded (per gate, to a multiple of 128) so the in-kernel gate slices are
    lane-aligned; the contraction axes stay at their natural widths so the
    activations need no padding at all.
    """
    wir, wiz, win, whr, whz, whn, br, bz, bin_, bhn = params
    H = whr.shape[0]
    Hp = _round_up(H, 128)
    padg = lambda a: jnp.pad(a, ((0, 0), (0, Hp - a.shape[1])))

    wi = jnp.concatenate([padg(wir), padg(wiz), padg(win)], axis=1)
    wh = jnp.concatenate([padg(whr), padg(whz), padg(whn)], axis=1)
    bi = jnp.concatenate([padg(br), padg(bz), padg(bin_)], axis=1)
    return (wi.astype(weight_dtype),          # (IN_M, 3*Hp)
            wh.astype(weight_dtype),          # (H,    3*Hp)
            bi.astype(jnp.float32),           # (1,    3*Hp)
            padg(bhn).astype(jnp.float32))    # (1,    Hp)


def init_mpnn_params(key, in_m, out):
    """Deterministic GRU parameters (gate order r, z, n), pre-transposed."""
    k = 1.0 / jnp.sqrt(jnp.float32(out))
    keys = jax.random.split(key, 12)
    u = lambda kk, shape: jax.random.uniform(kk, shape, jnp.float32, -k, k)
    # Input->hidden weights stored as (in_m, out) so the kernel does x @ W.
    wir = u(keys[0], (in_m, out))
    wiz = u(keys[1], (in_m, out))
    win = u(keys[2], (in_m, out))
    # Hidden->hidden weights stored as (out, out).
    whr = u(keys[3], (out, out))
    whz = u(keys[4], (out, out))
    whn = u(keys[5], (out, out))
    # Biases (2D (1, out) for TPU layout); b_ir+b_hr / b_iz+b_hz pre-summed.
    b_ir = u(keys[6], (1, out)); b_hr = u(keys[7], (1, out))
    b_iz = u(keys[8], (1, out)); b_hz = u(keys[9], (1, out))
    b_in = u(keys[10], (1, out)); b_hn = u(keys[11], (1, out))
    return (wir, wiz, win, whr, whz, whn,
            b_ir + b_hr, b_iz + b_hz, b_in, b_hn)


def mpnn_update_ref(h_v, m_v, params, *, matmul_dtype=jnp.float32):
    """Pure-JAX reference of the single-step GRU node update."""
    wir, wiz, win, whr, whz, whn, br, bz, bin_, bhn = params
    B, N, H = h_v.shape
    x = m_v.reshape(-1, m_v.shape[2]).astype(matmul_dtype)
    h = h_v.reshape(-1, H)
    hd = h.astype(matmul_dtype)
    dot = lambda a, w: jnp.dot(a, w.astype(matmul_dtype),
                               preferred_element_type=jnp.float32)
    r = jax.nn.sigmoid(dot(x, wir) + dot(hd, whr) + br)
    z = jax.nn.sigmoid(dot(x, wiz) + dot(hd, whz) + bz)
    n = jnp.tanh(dot(x, win) + bin_ + r * (dot(hd, whn) + bhn))
    h32 = h.astype(jnp.float32)
    return (n + z * (h32 - n)).astype(h_v.dtype).reshape(B, N, H)


if __name__ == "__main__":
    key = jax.random.PRNGKey(0)
    k_h, k_m, k_p, k_h2, k_m2, k_p3, k_h3, k_m3 = jax.random.split(key, 8)

    B, N = 2, 8          # batch of graphs, nodes per graph
    IN_M, OUT = 32, 32   # message dim (GRU input), hidden dim (GRU hidden)

    h_v = jax.random.normal(k_h, (B, N, OUT), jnp.float32)
    m_v = jax.random.normal(k_m, (B, N, IN_M), jnp.float32)
    params = init_mpnn_params(k_p, IN_M, OUT)
    packed = pack_mpnn_params(params)     # one-time weight fusion / packing

    out = jax.block_until_ready(mpnn_update(h_v, m_v, packed))
    assert out.shape == h_v.shape and out.dtype == h_v.dtype

    # Matched-precision reference (bf16 matmuls, f32 accumulation/gates).
    ref_bf16 = mpnn_update_ref(h_v, m_v, params, matmul_dtype=jnp.bfloat16)
    assert jnp.allclose(out, ref_bf16, atol=1e-4, rtol=1e-4)

    # Full-f32 reference: only bf16-matmul rounding should separate them.
    ref_f32 = mpnn_update_ref(h_v, m_v, params, matmul_dtype=jnp.float32)
    assert jnp.allclose(out, ref_f32, atol=5e-2, rtol=0.0)

    # Ragged row count (B*N not a multiple of the row tile): exercises the
    # masked edge block path that replaced wrapper-side padding.
    h_r = jax.random.normal(k_h2, (2, 5, OUT), jnp.float32)
    m_r = jax.random.normal(k_m2, (2, 5, IN_M), jnp.float32)
    out_r = jax.block_until_ready(mpnn_update(h_r, m_r, packed))
    ref_r = mpnn_update_ref(h_r, m_r, params, matmul_dtype=jnp.bfloat16)
    assert out_r.shape == h_r.shape
    assert jnp.allclose(out_r, ref_r, atol=2e-4, rtol=2e-4)

    # Lane-dense hidden size (multiple of 128): no gate-axis padding at all,
    # fully unmasked vector stores.
    H128 = 128
    params128 = init_mpnn_params(k_p3, H128, H128)
    packed128 = pack_mpnn_params(params128)
    h_d = jax.random.normal(k_h3, (2, 8, H128), jnp.float32)
    m_d = jax.random.normal(k_m3, (2, 8, H128), jnp.float32)
    out_d = jax.block_until_ready(mpnn_update(h_d, m_d, packed128))
    ref_d = mpnn_update_ref(h_d, m_d, params128, matmul_dtype=jnp.bfloat16)
    assert jnp.allclose(out_d, ref_d, atol=2e-4, rtol=2e-4)

    print("KERNEL_OK")
</pallas_src>

<mosaic_0001>
module attributes {stable_mosaic.version = 11 : i64} {
  func.func @_gru_update_kernel(%arg0: i32, %arg1: memref<8x32xf32, #tpu.memory_space<vmem>>, %arg2: memref<8x32xf32, #tpu.memory_space<vmem>>, %arg3: memref<32x384xbf16, #tpu.memory_space<vmem>>, %arg4: memref<32x384xbf16, #tpu.memory_space<vmem>>, %arg5: memref<1x384xf32, #tpu.memory_space<vmem>>, %arg6: memref<1x128xf32, #tpu.memory_space<vmem>>, %arg7: memref<8x32xf32, #tpu.memory_space<vmem>>) attributes {dimension_semantics = [#tpu.dimension_semantics<parallel>], iteration_bounds = array<i64: 2>, scalar_prefetch = 0 : i64, scratch_operands = 0 : i64, tpu.core_type = #tpu.core_type<tc>, window_params = [{transform_indices = @transform_0, window_bounds = array<i64: 8, 32>}, {transform_indices = @transform_1, window_bounds = array<i64: 8, 32>}, {pipeline_mode = #tpu.pipeline_mode<synchronous>, transform_indices = @transform_2, window_bounds = array<i64: 32, 384>}, {pipeline_mode = #tpu.pipeline_mode<synchronous>, transform_indices = @transform_3, window_bounds = array<i64: 32, 384>}, {pipeline_mode = #tpu.pipeline_mode<synchronous>, transform_indices = @transform_4, window_bounds = array<i64: 1, 384>}, {pipeline_mode = #tpu.pipeline_mode<synchronous>, transform_indices = @transform_5, window_bounds = array<i64: 1, 128>}, {transform_indices = @transform_6, window_bounds = array<i64: 8, 32>}]} {
    %c0 = arith.constant 0 : index
    %c0_0 = arith.constant 0 : index
    %0 = vector.load %arg2[%c0, %c0_0] : memref<8x32xf32, #tpu.memory_space<vmem>>, vector<8x32xf32>
    %1 = arith.truncf %0 : vector<8x32xf32> to vector<8x32xbf16>
    %c0_1 = arith.constant 0 : index
    %c0_2 = arith.constant 0 : index
    %2 = vector.load %arg1[%c0_1, %c0_2] : memref<8x32xf32, #tpu.memory_space<vmem>>, vector<8x32xf32>
    %3 = arith.truncf %2 : vector<8x32xf32> to vector<8x32xbf16>
    %c0_3 = arith.constant 0 : index
    %c0_4 = arith.constant 0 : index
    %4 = vector.load %arg3[%c0_3, %c0_4] : memref<32x384xbf16, #tpu.memory_space<vmem>>, vector<32x384xbf16>
    %cst = arith.constant dense<0.000000e+00> : vector<8x384xf32>
    %5 = tpu.matmul %3, %4, %cst {dimension_numbers = #tpu.dot_dimension_numbers<[1], [0], [0], [1], [0, 0, 1, 1], [], []>} : vector<8x32xbf16>, vector<32x384xbf16>, vector<8x384xf32> -> vector<8x384xf32>
    %c0_5 = arith.constant 0 : index
    %c0_6 = arith.constant 0 : index
    %6 = vector.load %arg5[%c0_5, %c0_6] : memref<1x384xf32, #tpu.memory_space<vmem>>, vector<1x384xf32>
    %7 = vector.broadcast %6 : vector<1x384xf32> to vector<8x384xf32>
    %8 = arith.addf %5, %7 : vector<8x384xf32>
    %c0_7 = arith.constant 0 : index
    %c0_8 = arith.constant 0 : index
    %9 = vector.load %arg4[%c0_7, %c0_8] : memref<32x384xbf16, #tpu.memory_space<vmem>>, vector<32x384xbf16>
    %cst_9 = arith.constant dense<0.000000e+00> : vector<8x384xf32>
    %10 = tpu.matmul %1, %9, %cst_9 {dimension_numbers = #tpu.dot_dimension_numbers<[1], [0], [0], [1], [0, 0, 1, 1], [], []>} : vector<8x32xbf16>, vector<32x384xbf16>, vector<8x384xf32> -> vector<8x384xf32>
    %11 = vector.extract_strided_slice %8 {offsets = [0, 0], sizes = [8, 32], strides = [1, 1]} : vector<8x384xf32> to vector<8x32xf32>
    %12 = vector.extract_strided_slice %10 {offsets = [0, 0], sizes = [8, 32], strides = [1, 1]} : vector<8x384xf32> to vector<8x32xf32>
    %13 = arith.addf %11, %12 : vector<8x32xf32>
    %14 = arith.negf %13 : vector<8x32xf32>
    %15 = math.exp %14 : vector<8x32xf32>
    %cst_10 = arith.constant 1.000000e+00 : f32
    %16 = vector.broadcast %cst_10 : f32 to vector<8x32xf32>
    %17 = arith.addf %16, %15 : vector<8x32xf32>
    %18 = arith.divf %16, %17 : vector<8x32xf32>
    %19 = vector.extract_strided_slice %8 {offsets = [0, 128], sizes = [8, 32], strides = [1, 1]} : vector<8x384xf32> to vector<8x32xf32>
    %20 = vector.extract_strided_slice %10 {offsets = [0, 128], sizes = [8, 32], strides = [1, 1]} : vector<8x384xf32> to vector<8x32xf32>
    %21 = arith.addf %19, %20 : vector<8x32xf32>
    %22 = arith.negf %21 : vector<8x32xf32>
    %23 = math.exp %22 : vector<8x32xf32>
    %cst_11 = arith.constant 1.000000e+00 : f32
    %24 = vector.broadcast %cst_11 : f32 to vector<8x32xf32>
    %25 = arith.addf %24, %23 : vector<8x32xf32>
    %26 = arith.divf %24, %25 : vector<8x32xf32>
    %27 = vector.extract_strided_slice %8 {offsets = [0, 256], sizes = [8, 32], strides = [1, 1]} : vector<8x384xf32> to vector<8x32xf32>
    %28 = vector.extract_strided_slice %10 {offsets = [0, 256], sizes = [8, 32], strides = [1, 1]} : vector<8x384xf32> to vector<8x32xf32>
    %c0_12 = arith.constant 0 : index
    %c0_13 = arith.constant 0 : index
    %29 = vector.load %arg6[%c0_12, %c0_13] : memref<1x128xf32, #tpu.memory_space<vmem>>, vector<1x32xf32>
    %30 = vector.broadcast %29 : vector<1x32xf32> to vector<8x32xf32>
    %31 = arith.addf %28, %30 : vector<8x32xf32>
    %32 = arith.mulf %18, %31 : vector<8x32xf32>
    %33 = arith.addf %27, %32 : vector<8x32xf32>
    %34 = math.tanh %33 : vector<8x32xf32>
    %35 = arith.subf %0, %34 : vector<8x32xf32>
    %36 = arith.mulf %26, %35 : vector<8x32xf32>
    %37 = arith.addf %34, %36 : vector<8x32xf32>
    %c0_14 = arith.constant 0 : index
    %c0_15 = arith.constant 0 : index
    %38 = vector.load %arg7[%c0_14, %c0_15] : memref<8x32xf32, #tpu.memory_space<vmem>>, vector<8x32xf32>
    tpu.vector_store %arg7[%c0_14, %c0_15], %37 {strides = array<i32>} : memref<8x32xf32, #tpu.memory_space<vmem>>, vector<8x32xf32>,
    return
  }
  func.func @transform_0(%arg0: i32) -> (i32, i32) {
    %c0_i32 = arith.constant 0 : i32
    %c0_i32_0 = arith.constant 0 : i32
    return %arg0, %c0_i32 : i32, i32
  }
  func.func @transform_1(%arg0: i32) -> (i32, i32) {
    %c0_i32 = arith.constant 0 : i32
    %c0_i32_0 = arith.constant 0 : i32
    return %arg0, %c0_i32 : i32, i32
  }
  func.func @transform_2(%arg0: i32) -> (i32, i32) {
    %c0_i32 = arith.constant 0 : i32
    %c0_i32_0 = arith.constant 0 : i32
    %c0_i32_1 = arith.constant 0 : i32
    return %c0_i32, %c0_i32_0 : i32, i32
  }
  func.func @transform_3(%arg0: i32) -> (i32, i32) {
    %c0_i32 = arith.constant 0 : i32
    %c0_i32_0 = arith.constant 0 : i32
    %c0_i32_1 = arith.constant 0 : i32
    return %c0_i32, %c0_i32_0 : i32, i32
  }
  func.func @transform_4(%arg0: i32) -> (i32, i32) {
    %c0_i32 = arith.constant 0 : i32
    %c0_i32_0 = arith.constant 0 : i32
    %c0_i32_1 = arith.constant 0 : i32
    return %c0_i32, %c0_i32_0 : i32, i32
  }
  func.func @transform_5(%arg0: i32) -> (i32, i32) {
    %c0_i32 = arith.constant 0 : i32
    %c0_i32_0 = arith.constant 0 : i32
    %c0_i32_1 = arith.constant 0 : i32
    return %c0_i32, %c0_i32_0 : i32, i32
  }
  func.func @transform_6(%arg0: i32) -> (i32, i32) {
    %c0_i32 = arith.constant 0 : i32
    %c0_i32_0 = arith.constant 0 : i32
    return %arg0, %c0_i32 : i32, i32
  }
}

module attributes {stable_mosaic.version = 11 : i64} {
  func.func @_gru_update_kernel(%arg0: i32, %arg1: memref<8x32xf32, #tpu.memory_space<vmem>>, %arg2: memref<8x32xf32, #tpu.memory_space<vmem>>, %arg3: memref<32x384xbf16, #tpu.memory_space<vmem>>, %arg4: memref<32x384xbf16, #tpu.memory_space<vmem>>, %arg5: memref<1x384xf32, #tpu.memory_space<vmem>>, %arg6: memref<1x128xf32, #tpu.memory_space<vmem>>, %arg7: memref<8x32xf32, #tpu.memory_space<vmem>>) attributes {dimension_semantics = [#tpu.dimension_semantics<parallel>], iteration_bounds = array<i64: 2>, scalar_prefetch = 0 : i64, scratch_operands = 0 : i64, tpu.core_type = #tpu.core_type<tc>, window_params = [{transform_indices = @transform_0, window_bounds = array<i64: 8, 32>}, {transform_indices = @transform_1, window_bounds = array<i64: 8, 32>}, {pipeline_mode = #tpu.pipeline_mode<synchronous>, transform_indices = @transform_2, window_bounds = array<i64: 32, 384>}, {pipeline_mode = #tpu.pipeline_mode<synchronous>, transform_indices = @transform_3, window_bounds = array<i64: 32, 384>}, {pipeline_mode = #tpu.pipeline_mode<synchronous>, transform_indices = @transform_4, window_bounds = array<i64: 1, 384>}, {pipeline_mode = #tpu.pipeline_mode<synchronous>, transform_indices = @transform_5, window_bounds = array<i64: 1, 128>}, {transform_indices = @transform_6, window_bounds = array<i64: 8, 32>}]} {
    %c0 = arith.constant 0 : index
    %c0_0 = arith.constant 0 : index
    %0 = vector.load %arg2[%c0, %c0_0] : memref<8x32xf32, #tpu.memory_space<vmem>>, vector<8x32xf32>
    %1 = arith.truncf %0 : vector<8x32xf32> to vector<8x32xbf16>
    %c0_1 = arith.constant 0 : index
    %c0_2 = arith.constant 0 : index
    %2 = vector.load %arg1[%c0_1, %c0_2] : memref<8x32xf32, #tpu.memory_space<vmem>>, vector<8x32xf32>
    %3 = arith.truncf %2 : vector<8x32xf32> to vector<8x32xbf16>
    %c0_3 = arith.constant 0 : index
    %c0_4 = arith.constant 0 : index
    %4 = vector.load %arg3[%c0_3, %c0_4] : memref<32x384xbf16, #tpu.memory_space<vmem>>, vector<32x384xbf16>
    %cst = arith.constant dense<0.000000e+00> : vector<8x384xf32>
    %5 = tpu.matmul %3, %4, %cst {dimension_numbers = #tpu.dot_dimension_numbers<[1], [0], [0], [1], [0, 0, 1, 1], [], []>} : vector<8x32xbf16>, vector<32x384xbf16>, vector<8x384xf32> -> vector<8x384xf32>
    %c0_5 = arith.constant 0 : index
    %c0_6 = arith.constant 0 : index
    %6 = vector.load %arg5[%c0_5, %c0_6] : memref<1x384xf32, #tpu.memory_space<vmem>>, vector<1x384xf32>
    %7 = vector.broadcast %6 : vector<1x384xf32> to vector<8x384xf32>
    %8 = arith.addf %5, %7 : vector<8x384xf32>
    %c0_7 = arith.constant 0 : index
    %c0_8 = arith.constant 0 : index
    %9 = vector.load %arg4[%c0_7, %c0_8] : memref<32x384xbf16, #tpu.memory_space<vmem>>, vector<32x384xbf16>
    %cst_9 = arith.constant dense<0.000000e+00> : vector<8x384xf32>
    %10 = tpu.matmul %1, %9, %cst_9 {dimension_numbers = #tpu.dot_dimension_numbers<[1], [0], [0], [1], [0, 0, 1, 1], [], []>} : vector<8x32xbf16>, vector<32x384xbf16>, vector<8x384xf32> -> vector<8x384xf32>
    %11 = vector.extract_strided_slice %8 {offsets = [0, 0], sizes = [8, 32], strides = [1, 1]} : vector<8x384xf32> to vector<8x32xf32>
    %12 = vector.extract_strided_slice %10 {offsets = [0, 0], sizes = [8, 32], strides = [1, 1]} : vector<8x384xf32> to vector<8x32xf32>
    %13 = arith.addf %11, %12 : vector<8x32xf32>
    %14 = arith.negf %13 : vector<8x32xf32>
    %15 = math.exp %14 : vector<8x32xf32>
    %cst_10 = arith.constant 1.000000e+00 : f32
    %16 = vector.broadcast %cst_10 : f32 to vector<8x32xf32>
    %17 = arith.addf %16, %15 : vector<8x32xf32>
    %18 = arith.divf %16, %17 : vector<8x32xf32>
    %19 = vector.extract_strided_slice %8 {offsets = [0, 128], sizes = [8, 32], strides = [1, 1]} : vector<8x384xf32> to vector<8x32xf32>
    %20 = vector.extract_strided_slice %10 {offsets = [0, 128], sizes = [8, 32], strides = [1, 1]} : vector<8x384xf32> to vector<8x32xf32>
    %21 = arith.addf %19, %20 : vector<8x32xf32>
    %22 = arith.negf %21 : vector<8x32xf32>
    %23 = math.exp %22 : vector<8x32xf32>
    %cst_11 = arith.constant 1.000000e+00 : f32
    %24 = vector.broadcast %cst_11 : f32 to vector<8x32xf32>
    %25 = arith.addf %24, %23 : vector<8x32xf32>
    %26 = arith.divf %24, %25 : vector<8x32xf32>
    %27 = vector.extract_strided_slice %8 {offsets = [0, 256], sizes = [8, 32], strides = [1, 1]} : vector<8x384xf32> to vector<8x32xf32>
    %28 = vector.extract_strided_slice %10 {offsets = [0, 256], sizes = [8, 32], strides = [1, 1]} : vector<8x384xf32> to vector<8x32xf32>
    %c0_12 = arith.constant 0 : index
    %c0_13 = arith.constant 0 : index
    %29 = vector.load %arg6[%c0_12, %c0_13] : memref<1x128xf32, #tpu.memory_space<vmem>>, vector<1x32xf32>
    %30 = vector.broadcast %29 : vector<1x32xf32> to vector<8x32xf32>
    %31 = arith.addf %28, %30 : vector<8x32xf32>
    %32 = arith.mulf %18, %31 : vector<8x32xf32>
    %33 = arith.addf %27, %32 : vector<8x32xf32>
    %34 = math.tanh %33 : vector<8x32xf32>
    %35 = arith.subf %0, %34 : vector<8x32xf32>
    %36 = arith.mulf %26, %35 : vector<8x32xf32>
    %37 = arith.addf %34, %36 : vector<8x32xf32>
    %c0_14 = arith.constant 0 : index
    %c0_15 = arith.constant 0 : index
    %38 = vector.load %arg7[%c0_14, %c0_15] : memref<8x32xf32, #tpu.memory_space<vmem>>, vector<8x32xf32>
    tpu.vector_store %arg7[%c0_14, %c0_15], %37 {strides = array<i32>} : memref<8x32xf32, #tpu.memory_space<vmem>>, vector<8x32xf32>,
    return
  }
  func.func @transform_0(%arg0: i32) -> (i32, i32) {
    %c0_i32 = arith.constant 0 : i32
    %c0_i32_0 = arith.constant 0 : i32
    return %arg0, %c0_i32 : i32, i32
  }
  func.func @transform_1(%arg0: i32) -> (i32, i32) {
    %c0_i32 = arith.constant 0 : i32
    %c0_i32_0 = arith.constant 0 : i32
    return %arg0, %c0_i32 : i32, i32
  }
  func.func @transform_2(%arg0: i32) -> (i32, i32) {
    %c0_i32 = arith.constant 0 : i32
    %c0_i32_0 = arith.constant 0 : i32
    %c0_i32_1 = arith.constant 0 : i32
    return %c0_i32, %c0_i32_0 : i32, i32
  }
  func.func @transform_3(%arg0: i32) -> (i32, i32) {
    %c0_i32 = arith.constant 0 : i32
    %c0_i32_0 = arith.constant 0 : i32
    %c0_i32_1 = arith.constant 0 : i32
    return %c0_i32, %c0_i32_0 : i32, i32
  }
  func.func @transform_4(%arg0: i32) -> (i32, i32) {
    %c0_i32 = arith.constant 0 : i32
    %c0_i32_0 = arith.constant 0 : i32
    %c0_i32_1 = arith.constant 0 : i32
    return %c0_i32, %c0_i32_0 : i32, i32
  }
  func.func @transform_5(%arg0: i32) -> (i32, i32) {
    %c0_i32 = arith.constant 0 : i32
    %c0_i32_0 = arith.constant 0 : i32
    %c0_i32_1 = arith.constant 0 : i32
    return %c0_i32, %c0_i32_0 : i32, i32
  }
  func.func @transform_6(%arg0: i32) -> (i32, i32) {
    %c0_i32 = arith.constant 0 : i32
    %c0_i32_0 = arith.constant 0 : i32
    return %arg0, %c0_i32 : i32, i32
  }
}

</mosaic_0001>

<llo_original>
// kernel: _mpnn_update_packed.1
$region0: #{_mpnn_update_packed.1}
  #allocation0 [shape = 'u32[]', space=smem, size = 0x4, offset = 0x4, fixed_abs, tag = 'smem constant byte address 0x4 - core index']
  #allocation1 [shape = 'u32[72,128]{1,0:T(1,128)}', space=vmem, size = 0x9000, scoped, tag = 'internal scratch']
  %s0 = inlined_call_operand.hbm [shape: f32[16,32], index: 0, kind: input, shape index: {}]
  %s1 = inlined_call_operand.hbm [shape: f32[16,32], index: 1, kind: input, shape index: {}]
  %s2 = inlined_call_operand.hbm [shape: bf16[32,384], index: 2, kind: input, shape index: {}]
  %s3 = inlined_call_operand.hbm [shape: bf16[32,384], index: 3, kind: input, shape index: {}]
  %s4 = inlined_call_operand.vmem [shape: f32[1,384], index: 4, kind: input, shape index: {}]
  %s5 = inlined_call_operand.vmem [shape: f32[1,128], index: 5, kind: input, shape index: {}]
  %s6 = inlined_call_operand.hbm [shape: f32[16,32], index: 6, kind: output, shape index: {}]
  %s7 = sld [smem:[#allocation0]]
  $region73: #{_mpnn_update_packed.1} parent=0
    _
  %s9 = ssub.s32 1, %s7
  %s10 = scalar_select 0, %s9, %s7
  $region1: #{_mpnn_update_packed.1} parent=0
    #allocation2 [shape = 'u8[8192]{0}', space=vmem, size = 0x2000, scoped, tag = 'input window, operand 0']
    #allocation3 [shape = 's32[2]{0}', space=sflag, size = 0x8, scoped, tag = 'scoped memory for _mpnn_update_packed.1']
    #allocation4 [shape = 's32[2]{0}', space=sflag, size = 0x8, scoped, tag = 'scoped memory for _mpnn_update_packed.1']
    #allocation5 [shape = 'u8[8192]{0}', space=vmem, size = 0x2000, scoped, tag = 'input window, operand 1']
    #allocation6 [shape = 's32[2]{0}', space=sflag, size = 0x8, scoped, tag = 'scoped memory for _mpnn_update_packed.1']
    #allocation7 [shape = 'u8[24576]{0}', space=vmem, size = 0x6000, scoped, tag = 'input window, operand 2, single buffered']
    #allocation8 [shape = 'u8[24576]{0}', space=vmem, size = 0x6000, scoped, tag = 'input window, operand 3, single buffered']
    #allocation9 [shape = 's32[1]{0}', space=sflag, size = 0x4, scoped, tag = 'scoped memory for _mpnn_update_packed.1']
    #allocation10 [shape = 'u8[8192]{0}', space=vmem, size = 0x2000, scoped, tag = 'output window, operand 0']
    %11 = vsyncpa [#allocation3], 0
    %s12 = scalar_lea.sflag [#allocation3], 1
    %13 = vsyncpa %s12, 0
    %14 = vsyncpa [#allocation6], 0
    %s15 = scalar_lea.sflag [#allocation6], 1
    %16 = vsyncpa %s15, 0
    %17 = vsyncpa [#allocation9], 0
    %18 = vsyncpa [#allocation4], 0
    %s19 = scalar_lea.sflag [#allocation4], 1
    %20 = vsyncpa %s19, 0
    loop: start=0, step=1, limit=4
    $region2: #{_mpnn_update_packed.1} parent=1 // loop_pre_header
      _
    $region3: #{_mpnn_update_packed.1} parent=1 // loop_header
      %s22 = sphi 0, %s26
      %p23 = scmp.ge.s32.totalorder %s22, 4
      %s32 = sphi 0, %s34
      %s35 = sphi 0, %s32
      %s36 = sphi 0, %s35
      %s52 = sphi 0, %s36
      %s58 = sphi 0, %s60
      %s61 = sphi 0, %s58
      %s62 = sphi 0, %s61
      %s78 = sphi 0, %s62
      %s82 = sphi 0, %s82
      %s84 = sphi 0, %s82
      %s85 = sphi 0, %s84
      %s99 = sphi 0, %s85
      %s103 = sphi 0, %s103
      %s105 = sphi 0, %s103
      %s106 = sphi 0, %s105
      %s120 = sphi 0, %s106
      %s124 = sphi 0, %s124
      %s126 = sphi 0, %s124
      %s127 = sphi 0, %s126
      %s141 = sphi 0, %s127
      %s145 = sphi 0, %s145
      %s147 = sphi 0, %s145
      %s148 = sphi 0, %s147
      %s162 = sphi 0, %s148
      %s168 = sphi 0, %s170
      %s171 = sphi 0, %s168
      %s172 = sphi 0, %s171
      %s188 = sphi 0, %s172
    $region4: #{_mpnn_update_packed.1} parent=1 // loop_header_branch
      %25 = sbr.rel (%p23) target = $region8
    $region5: #{_mpnn_update_packed.1} parent=1 // loop_body
      %s27 = ssub.s32 %s22, 1
      %s28 = ssub.s32 %s22, 2
      %s29 = sadd.s32 %s22, 1
      %s30 = ssub.s32 %s22, %s29
      %p31 = scmp.eq.s32.totalorder %s30, 0
      %s33 = sadd.s32 %s32, 1
      %s34 = scalar_select %p31, %s32, %s33
      %p37 = pneg %p31
      %p38 = scmp.eq.s32.totalorder %s22, 1
      %p39 = por %p37, %p38
      %p40 = scmp.ne.s32.totalorder %s32, %s35
      %p41 = scmp.eq.s32.totalorder %s22, 0
      %p42 = por %p40, %p41
      %p43 = scmp.ne.s32.totalorder %s32, %s35
      %p44 = scmp.eq.s32.totalorder %s27, 1
      %p45 = por %p43, %p44
      %p46 = scmp.ne.s32.totalorder %s35, %s36
      %p47 = scmp.eq.s32.totalorder %s27, 0
      %p48 = por %p46, %p47
      %p49 = scmp.ne.s32.totalorder %s35, %s36
      %p50 = scmp.eq.s32.totalorder %s28, 1
      %p51 = por %p49, %p50
      %p53 = scmp.ne.s32.totalorder %s36, %s52
      %p54 = scmp.eq.s32.totalorder %s28, 0
      %p55 = por %p53, %p54
      %s56 = ssub.s32 %s22, %s29
      %p57 = scmp.eq.s32.totalorder %s56, 0
      %s59 = sadd.s32 %s58, 1
      %s60 = scalar_select %p57, %s58, %s59
      %p63 = pneg %p57
      %p64 = scmp.eq.s32.totalorder %s22, 1
      %p65 = por %p63, %p64
      %p66 = scmp.ne.s32.totalorder %s58, %s61
      %p67 = scmp.eq.s32.totalorder %s22, 0
      %p68 = por %p66, %p67
      %p69 = scmp.ne.s32.totalorder %s58, %s61
      %p70 = scmp.eq.s32.totalorder %s27, 1
      %p71 = por %p69, %p70
      %p72 = scmp.ne.s32.totalorder %s61, %s62
      %p73 = scmp.eq.s32.totalorder %s27, 0
      %p74 = por %p72, %p73
      %p75 = scmp.ne.s32.totalorder %s61, %s62
      %p76 = scmp.eq.s32.totalorder %s28, 1
      %p77 = por %p75, %p76
      %p79 = scmp.ne.s32.totalorder %s62, %s78
      %p80 = scmp.eq.s32.totalorder %s28, 0
      %p81 = por %p79, %p80
      %s83 = sadd.s32 %s82, 1
      %p86 = scmp.eq.s32.totalorder %s22, 1
      %p87 = scmp.ne.s32.totalorder %s82, %s84
      %p88 = scmp.eq.s32.totalorder %s22, 0
      %p89 = por %p87, %p88
      %p90 = scmp.ne.s32.totalorder %s82, %s84
      %p91 = scmp.eq.s32.totalorder %s27, 1
      %p92 = por %p90, %p91
      %p93 = scmp.ne.s32.totalorder %s84, %s85
      %p94 = scmp.eq.s32.totalorder %s27, 0
      %p95 = por %p93, %p94
      %p96 = scmp.ne.s32.totalorder %s84, %s85
      %p97 = scmp.eq.s32.totalorder %s28, 1
      %p98 = por %p96, %p97
      %p100 = scmp.ne.s32.totalorder %s85, %s99
      %p101 = scmp.eq.s32.totalorder %s28, 0
      %p102 = por %p100, %p101
      %s104 = sadd.s32 %s103, 1
      %p107 = scmp.eq.s32.totalorder %s22, 1
      %p108 = scmp.ne.s32.totalorder %s103, %s105
      %p109 = scmp.eq.s32.totalorder %s22, 0
      %p110 = por %p108, %p109
      %p111 = scmp.ne.s32.totalorder %s103, %s105
      %p112 = scmp.eq.s32.totalorder %s27, 1
      %p113 = por %p111, %p112
      %p114 = scmp.ne.s32.totalorder %s105, %s106
      %p115 = scmp.eq.s32.totalorder %s27, 0
      %p116 = por %p114, %p115
      %p117 = scmp.ne.s32.totalorder %s105, %s106
      %p118 = scmp.eq.s32.totalorder %s28, 1
      %p119 = por %p117, %p118
      %p121 = scmp.ne.s32.totalorder %s106, %s120
      %p122 = scmp.eq.s32.totalorder %s28, 0
      %p123 = por %p121, %p122
      %s125 = sadd.s32 %s124, 1
      %p128 = scmp.eq.s32.totalorder %s22, 1
      %p129 = scmp.ne.s32.totalorder %s124, %s126
      %p130 = scmp.eq.s32.totalorder %s22, 0
      %p131 = por %p129, %p130
      %p132 = scmp.ne.s32.totalorder %s124, %s126
      %p133 = scmp.eq.s32.totalorder %s27, 1
      %p134 = por %p132, %p133
      %p135 = scmp.ne.s32.totalorder %s126, %s127
      %p136 = scmp.eq.s32.totalorder %s27, 0
      %p137 = por %p135, %p136
      %p138 = scmp.ne.s32.totalorder %s126, %s127
      %p139 = scmp.eq.s32.totalorder %s28, 1
      %p140 = por %p138, %p139
      %p142 = scmp.ne.s32.totalorder %s127, %s141
      %p143 = scmp.eq.s32.totalorder %s28, 0
      %p144 = por %p142, %p143
      %s146 = sadd.s32 %s145, 1
      %p149 = scmp.eq.s32.totalorder %s22, 1
      %p150 = scmp.ne.s32.totalorder %s145, %s147
      %p151 = scmp.eq.s32.totalorder %s22, 0
      %p152 = por %p150, %p151
      %p153 = scmp.ne.s32.totalorder %s145, %s147
      %p154 = scmp.eq.s32.totalorder %s27, 1
      %p155 = por %p153, %p154
      %p156 = scmp.ne.s32.totalorder %s147, %s148
      %p157 = scmp.eq.s32.totalorder %s27, 0
      %p158 = por %p156, %p157
      %p159 = scmp.ne.s32.totalorder %s147, %s148
      %p160 = scmp.eq.s32.totalorder %s28, 1
      %p161 = por %p159, %p160
      %p163 = scmp.ne.s32.totalorder %s148, %s162
      %p164 = scmp.eq.s32.totalorder %s28, 0
      %p165 = por %p163, %p164
      %s166 = ssub.s32 %s22, %s29
      %p167 = scmp.eq.s32.totalorder %s166, 0
      %s169 = sadd.s32 %s168, 1
      %s170 = scalar_select %p167, %s168, %s169
      %p173 = pneg %p167
      %p174 = scmp.eq.s32.totalorder %s22, 1
      %p175 = por %p173, %p174
      %p176 = scmp.ne.s32.totalorder %s168, %s171
      %p177 = scmp.eq.s32.totalorder %s22, 0
      %p178 = por %p176, %p177
      %p179 = scmp.ne.s32.totalorder %s168, %s171
      %p180 = scmp.eq.s32.totalorder %s27, 1
      %p181 = por %p179, %p180
      %p182 = scmp.ne.s32.totalorder %s171, %s172
      %p183 = scmp.eq.s32.totalorder %s27, 0
      %p184 = por %p182, %p183
      %p185 = scmp.ne.s32.totalorder %s171, %s172
      %p186 = scmp.eq.s32.totalorder %s28, 1
      %p187 = por %p185, %p186
      %p189 = scmp.ne.s32.totalorder %s172, %s188
      %p190 = scmp.eq.s32.totalorder %s28, 0
      %p191 = por %p189, %p190
      %p192 = scmp.le.s32.totalorder 1, %s22
      %p193 = scmp.lt.s32.totalorder %s22, 3
      %p194 = pnand %p192, %p193
      %p195 = pneg %p194
      // Predicated region
      $region9: #{_mpnn_update_packed.1} parent=5 // pred_check
        _
      $region10: #{_mpnn_update_packed.1} parent=5 // pred_check_branch
        %197 = sbr.rel (%p194) target = $region12
      $region11: #{_mpnn_update_packed.1} parent=5 // pred_region
        %s198 = ssub.s32 %s22, 1
        // Predicated region
        $region13: #{_mpnn_update_packed.1} parent=11 // pred_check
          %p199 = pneg %p95
        $region14: #{_mpnn_update_packed.1} parent=11 // pred_check_branch
          %201 = sbr.rel (%p199) target = $region16
        $region15: #{_mpnn_update_packed.1} parent=11 // pred_region
          %203 = vsyncadd [#allocation6], 0
          %s204 = sshll.u32 %s2, 4
          %s205 = int_to_ptr.hbm [resolvable:$true] %s204
          %s206 = sshll.u32 [#allocation7], 4
          %s207 = int_to_ptr.vmem [resolvable:$true] %s206
          %212 = dma.hbm_to_vmem [thread:$0]  %s205, 768, %s207, [#allocation6], 192, 192, 12
        $region16: #{_mpnn_update_packed.1} parent=11 // pred_fallthru
          _
        // Predicated region
        $region17: #{_mpnn_update_packed.1} parent=11 // pred_check
          %p213 = pneg %p116
        $region18: #{_mpnn_update_packed.1} parent=11 // pred_check_branch
          %215 = sbr.rel (%p213) target = $region20
        $region19: #{_mpnn_update_packed.1} parent=11 // pred_region
          %217 = vsyncadd [#allocation9], 0
          %s218 = sshll.u32 %s3, 4
          %s219 = int_to_ptr.hbm [resolvable:$true] %s218
          %s220 = sshll.u32 [#allocation8], 4
          %s221 = int_to_ptr.vmem [resolvable:$true] %s220
          %226 = dma.hbm_to_vmem [thread:$0]  %s219, 768, %s221, [#allocation9], 192, 192, 12
        $region20: #{_mpnn_update_packed.1} parent=11 // pred_fallthru
          _
        // Predicated region
        $region21: #{_mpnn_update_packed.1} parent=11 // pred_check
          %p227 = pneg %p137
        $region22: #{_mpnn_update_packed.1} parent=11 // pred_check_branch
          %229 = sbr.rel (%p227) target = $region24
        $region23: #{_mpnn_update_packed.1} parent=11 // pred_region
          _
        $region24: #{_mpnn_update_packed.1} parent=11 // pred_fallthru
          _
        // Predicated region
        $region25: #{_mpnn_update_packed.1} parent=11 // pred_check
          %p230 = pneg %p158
        $region26: #{_mpnn_update_packed.1} parent=11 // pred_check_branch
          %232 = sbr.rel (%p230) target = $region28
        $region27: #{_mpnn_update_packed.1} parent=11 // pred_region
          _
        $region28: #{_mpnn_update_packed.1} parent=11 // pred_fallthru
          _
      $region12: #{_mpnn_update_packed.1} parent=5 // pred_fallthru
        _
      %p233 = scmp.lt.s32.totalorder %s22, 2
      // Predicated region
      $region29: #{_mpnn_update_packed.1} parent=5 // pred_check
        %p234 = pneg %p233
      $region30: #{_mpnn_update_packed.1} parent=5 // pred_check_branch
        %236 = sbr.rel (%p234) target = $region32
      $region31: #{_mpnn_update_packed.1} parent=5 // pred_region
        // Predicated region
        $region33: #{_mpnn_update_packed.1} parent=31 // pred_check
          %p237 = pneg %p42
        $region34: #{_mpnn_update_packed.1} parent=31 // pred_check_branch
          %239 = sbr.rel (%p237) target = $region36
        $region35: #{_mpnn_update_packed.1} parent=31 // pred_region
          %s240 = sand.u32 %s32, 1
          %s241 = scalar_lea.sflag [#allocation3], %s240
          %s242 = sand.u32 %s32, 1
          %s243 = smul.addr %s242, 8
          %s244 = scalar_lea.vmem [#allocation2], %s243
          %246 = vsyncadd %s241, 0
          %s247 = smul.addr %s22, 8
          %s248 = scalar_lea.hbm %s0, %s247
          %s250 = sshll.u32 %s248, 4
          %s251 = int_to_ptr.hbm [resolvable:$true] %s250
          %s252 = sshll.u32 %s244, 4
          %s253 = int_to_ptr.vmem [resolvable:$true] %s252
          %255 = dma.hbm_to_vmem [thread:$0]  %s251, 128, %s253, %s241
        $region36: #{_mpnn_update_packed.1} parent=31 // pred_fallthru
          _
        // Predicated region
        $region37: #{_mpnn_update_packed.1} parent=31 // pred_check
          %p256 = pneg %p68
        $region38: #{_mpnn_update_packed.1} parent=31 // pred_check_branch
          %258 = sbr.rel (%p256) target = $region40
        $region39: #{_mpnn_update_packed.1} parent=31 // pred_region
          %s259 = sand.u32 %s22, 1
          %s260 = scalar_lea.sflag [#allocation6], %s259
          %s261 = sand.u32 %s58, 1
          %s262 = smul.addr %s261, 8
          %s263 = scalar_lea.vmem [#allocation5], %s262
          %265 = vsyncadd %s260, 0
          %s266 = smul.addr %s22, 8
          %s267 = scalar_lea.hbm %s1, %s266
          %s269 = sshll.u32 %s267, 4
          %s270 = int_to_ptr.hbm [resolvable:$true] %s269
          %s271 = sshll.u32 %s263, 4
          %s272 = int_to_ptr.vmem [resolvable:$true] %s271
          %274 = dma.hbm_to_vmem [thread:$0]  %s270, 128, %s272, %s260
        $region40: #{_mpnn_update_packed.1} parent=31 // pred_fallthru
          _
      $region32: #{_mpnn_update_packed.1} parent=5 // pred_fallthru
        _
      %p275 = scmp.le.s32.totalorder 1, %s22
      %p276 = scmp.lt.s32.totalorder %s22, 3
      %p277 = pnand %p275, %p276
      %p278 = pneg %p277
      // Predicated region
      $region41: #{_mpnn_update_packed.1} parent=5 // pred_check
        _
      $region42: #{_mpnn_update_packed.1} parent=5 // pred_check_branch
        %280 = sbr.rel (%p277) target = $region44
      $region43: #{_mpnn_update_packed.1} parent=5 // pred_region
        %s281 = ssub.s32 %s22, 1
        %s282 = sand.u32 %s35, 1
        %s283 = scalar_lea.sflag [#allocation3], %s282
        %s284 = sand.u32 %s35, 1
        %s285 = smul.addr %s284, 8
        %s286 = scalar_lea.vmem [#allocation2], %s285
        // Predicated region
        $region45: #{_mpnn_update_packed.1} parent=43 // pred_check
          %p287 = pneg %p48
        $region46: #{_mpnn_update_packed.1} parent=43 // pred_check_branch
          %289 = sbr.rel (%p287) target = $region48
        $region47: #{_mpnn_update_packed.1} parent=43 // pred_region
          %291 = dma.done %s283, 128
        $region48: #{_mpnn_update_packed.1} parent=43 // pred_fallthru
          _
        %s292 = sand.u32 %s27, 1
        %s293 = scalar_lea.sflag [#allocation6], %s292
        %s294 = sand.u32 %s61, 1
        %s295 = smul.addr %s294, 8
        %s296 = scalar_lea.vmem [#allocation5], %s295
        // Predicated region
        $region49: #{_mpnn_update_packed.1} parent=43 // pred_check
          %p297 = pneg %p74
        $region50: #{_mpnn_update_packed.1} parent=43 // pred_check_branch
          %299 = sbr.rel (%p297) target = $region52
        $region51: #{_mpnn_update_packed.1} parent=43 // pred_region
          %301 = dma.done %s293, 128
        $region52: #{_mpnn_update_packed.1} parent=43 // pred_fallthru
          _
        // Predicated region
        $region53: #{_mpnn_update_packed.1} parent=43 // pred_check
          %p302 = pneg %p95
        $region54: #{_mpnn_update_packed.1} parent=43 // pred_check_branch
          %304 = sbr.rel (%p302) target = $region56
        $region55: #{_mpnn_update_packed.1} parent=43 // pred_region
          %306 = dma.done [#allocation6], 768
        $region56: #{_mpnn_update_packed.1} parent=43 // pred_fallthru
          _
        // Predicated region
        $region57: #{_mpnn_update_packed.1} parent=43 // pred_check
          %p307 = pneg %p116
        $region58: #{_mpnn_update_packed.1} parent=43 // pred_check_branch
          %309 = sbr.rel (%p307) target = $region60
        $region59: #{_mpnn_update_packed.1} parent=43 // pred_region
          %311 = dma.done [#allocation9], 768
        $region60: #{_mpnn_update_packed.1} parent=43 // pred_fallthru
          _
        %s312 = sand.u32 %s35, 1
        %s313 = scalar_lea.sflag [#allocation3], %s312
        %s314 = sand.u32 %s35, 1
        %s315 = smul.addr %s314, 8
        %s316 = scalar_lea.vmem [#allocation2], %s315
        %p317 = pneg %p48
        %p318 = pneg %p45
        %s319 = sand.u32 %s27, 1
        %s320 = scalar_lea.sflag [#allocation6], %s319
        %s321 = sand.u32 %s61, 1
        %s322 = smul.addr %s321, 8
        %s323 = scalar_lea.vmem [#allocation5], %s322
        %p324 = pneg %p74
        %p325 = pneg %p71
        %p326 = pneg %p95
        %p327 = pneg %p92
        %p328 = pneg %p116
        %p329 = pneg %p113
        %p330 = pneg %p137
        %p331 = pneg %p134
        %p332 = pneg %p158
        %p333 = pneg %p155
        %p334 = pneg %p184
        %p335 = pneg %p181
        %s336 = sand.u32 %s171, 1
        %s337 = scalar_lea.sflag [#allocation4], %s336
        %s338 = sand.u32 %s171, 1
        %s339 = smul.addr %s338, 8
        %s340 = scalar_lea.vmem [#allocation10], %s339
        %v342 = vld [vmem:[%s296] sm:$0xff]
        %v343 = vpack.c.bf16 %v342, %v342
        %v344 = vld [vmem:[%s286] sm:$0xff]
        %v345 = vpack.c.bf16 %v344, %v344
        %v346 = vld [vmem:[#allocation7] sm:$0xff]
        %v347 = vld [vmem:[#allocation7 + $0x8] sm:$0xf]
        %v348 = vld [vmem:[#allocation7 + $0xc] sm:$0xff]
        %v349 = vld [vmem:[#allocation7 + $0x14] sm:$0xf]
        %v350 = vld [vmem:[#allocation7 + $0x18] sm:$0xff]
        %v351 = vld [vmem:[#allocation7 + $0x20] sm:$0xf]
        %v352 = vld [vmem:[#allocation7 + $0x24] sm:$0xff]
        %v353 = vld [vmem:[#allocation7 + $0x2c] sm:$0xf]
        %v354 = vld [vmem:[%s4] sm:$0x7]
        %v356 = vperm.slane %v354, 0
        %v357 = vperm.slane %v354, 1
        %v358 = vperm.slane %v354, 2
        %v370 = vunpack.c.l.b16 %v346
        %v371 = vunpack.c.h.b16 %v346
        %v372 = vunpack.c.l.b16 %v347
        %v373 = vunpack.c.l.b16 %v348
        %v374 = vunpack.c.h.b16 %v348
        %v375 = vunpack.c.l.b16 %v349
        %v376 = vunpack.c.l.b16 %v350
        %v377 = vunpack.c.h.b16 %v350
        %v378 = vunpack.c.l.b16 %v351
        %v379 = vunpack.c.l.b16 %v352
        %v380 = vunpack.c.h.b16 %v352
        %v381 = vunpack.c.l.b16 %v353
        %v382 = vpack.c.b16 %v373, %v370
        %v383 = vpack.c.b16 %v374, %v371
        %v384 = vpack.c.b16 %v375, %v372
        %v385 = vpack.c.b16 %v379, %v376
        %v386 = vpack.c.b16 %v380, %v377
        %v387 = vpack.c.b16 %v381, %v378
        %vm394 = vcmask 261120
        %v396 = vsel %vm394, %v345, 0
        %398 = vmatpush.bf16.msra.mxu0 0
        %399 = vmatpush.bf16.msra.mxu0 0
        %400 = vmatpush.bf16.msra.mxu0 0
        %401 = vmatpush.bf16.msra.mxu0 0
        %402 = vmatpush.bf16.msra.mxu0 0
        %403 = vmatpush.bf16.msra.mxu0 0
        %404 = vmatpush.bf16.msra.mxu0 %v385
        %405 = vmatpush.bf16.msra.mxu0 %v382
        %406 = vmatmul.bf16.gmra.mxu0 %v396
        %v407 = vpop.f32.mrf.mxu0
        %v408 = vadd.f32 %v356, %v407
        %v409 = vpop.f32.mrf.mxu0
        %410 = vdwg.mxu0
        %411 = vmatpush.bf16.msra.mxu0 0
        %412 = vmatpush.bf16.msra.mxu0 0
        %413 = vmatpush.bf16.msra.mxu0 0
        %414 = vmatpush.bf16.msra.mxu0 0
        %415 = vmatpush.bf16.msra.mxu0 0
        %416 = vmatpush.bf16.msra.mxu0 0
        %417 = vmatpush.bf16.msra.mxu0 %v386
        %418 = vmatpush.bf16.msra.mxu0 %v383
        %419 = vmatmul.bf16.gmra.mxu0 %v396
        %v420 = vpop.f32.mrf.mxu0
        %v421 = vadd.f32 %v357, %v420
        %v422 = vpop.f32.mrf.mxu0
        %423 = vdwg.mxu0
        %424 = vmatpush.bf16.msra.mxu0 0
        %425 = vmatpush.bf16.msra.mxu0 0
        %426 = vmatpush.bf16.msra.mxu0 0
        %427 = vmatpush.bf16.msra.mxu0 0
        %428 = vmatpush.bf16.msra.mxu0 0
        %429 = vmatpush.bf16.msra.mxu0 0
        %430 = vmatpush.bf16.msra.mxu0 %v387
        %431 = vmatpush.bf16.msra.mxu0 %v384
        %432 = vmatmul.bf16.gmra.mxu0 %v396
        %v433 = vpop.f32.mrf.mxu0
        %v434 = vadd.f32 %v358, %v433
        %v435 = vpop.f32.mrf.mxu0
        %436 = vdwg.mxu0
        %v437 = vld [vmem:[#allocation8] sm:$0xff]
        %v438 = vld [vmem:[#allocation8 + $0x8] sm:$0xf]
        %v439 = vld [vmem:[#allocation8 + $0xc] sm:$0xff]
        %v440 = vld [vmem:[#allocation8 + $0x14] sm:$0xf]
        %v441 = vld [vmem:[#allocation8 + $0x18] sm:$0xff]
        %v442 = vld [vmem:[#allocation8 + $0x20] sm:$0xf]
        %v443 = vld [vmem:[#allocation8 + $0x24] sm:$0xff]
        %v444 = vld [vmem:[#allocation8 + $0x2c] sm:$0xf]
        %v453 = vunpack.c.l.b16 %v437
        %v454 = vunpack.c.h.b16 %v437
        %v455 = vunpack.c.l.b16 %v438
        %v456 = vunpack.c.l.b16 %v439
        %v457 = vunpack.c.h.b16 %v439
        %v458 = vunpack.c.l.b16 %v440
        %v459 = vunpack.c.l.b16 %v441
        %v460 = vunpack.c.h.b16 %v441
        %v461 = vunpack.c.l.b16 %v442
        %v462 = vunpack.c.l.b16 %v443
        %v463 = vunpack.c.h.b16 %v443
        %v464 = vunpack.c.l.b16 %v444
        %v465 = vpack.c.b16 %v456, %v453
        %v466 = vpack.c.b16 %v457, %v454
        %v467 = vpack.c.b16 %v458, %v455
        %v468 = vpack.c.b16 %v462, %v459
        %v469 = vpack.c.b16 %v463, %v460
        %v470 = vpack.c.b16 %v464, %v461
        %v478 = vsel %vm394, %v343, 0
        %480 = vmatpush.bf16.msra.mxu0 0
        %481 = vmatpush.bf16.msra.mxu0 0
        %482 = vmatpush.bf16.msra.mxu0 0
        %483 = vmatpush.bf16.msra.mxu0 0
        %484 = vmatpush.bf16.msra.mxu0 0
        %485 = vmatpush.bf16.msra.mxu0 0
        %486 = vmatpush.bf16.msra.mxu0 %v468
        %487 = vmatpush.bf16.msra.mxu0 %v465
        %488 = vmatmul.bf16.gmra.mxu0 %v478
        %v489 = vpop.f32.mrf.mxu0
        %v490 = vadd.f32 0.0, %v489
        %v491 = vpop.f32.mrf.mxu0
        %492 = vdwg.mxu0
        %493 = vmatpush.bf16.msra.mxu0 0
        %494 = vmatpush.bf16.msra.mxu0 0
        %495 = vmatpush.bf16.msra.mxu0 0
        %496 = vmatpush.bf16.msra.mxu0 0
        %497 = vmatpush.bf16.msra.mxu0 0
        %498 = vmatpush.bf16.msra.mxu0 0
        %499 = vmatpush.bf16.msra.mxu0 %v469
        %500 = vmatpush.bf16.msra.mxu0 %v466
        %501 = vmatmul.bf16.gmra.mxu0 %v478
        %v502 = vpop.f32.mrf.mxu0
        %v503 = vadd.f32 0.0, %v502
        %v504 = vpop.f32.mrf.mxu0
        %505 = vdwg.mxu0
        %506 = vmatpush.bf16.msra.mxu0 0
        %507 = vmatpush.bf16.msra.mxu0 0
        %508 = vmatpush.bf16.msra.mxu0 0
        %509 = vmatpush.bf16.msra.mxu0 0
        %510 = vmatpush.bf16.msra.mxu0 0
        %511 = vmatpush.bf16.msra.mxu0 0
        %512 = vmatpush.bf16.msra.mxu0 %v470
        %513 = vmatpush.bf16.msra.mxu0 %v467
        %514 = vmatmul.bf16.gmra.mxu0 %v478
        %v515 = vpop.f32.mrf.mxu0
        %v516 = vadd.f32 0.0, %v515
        %v517 = vpop.f32.mrf.mxu0
        %518 = vdwg.mxu0
        %v519 = vadd.f32 %v408, %v490
        %v520 = vxor.u32 %v519, 2147483648
        %v521 = vmul.f32 %v520, 1.442695
        %v522 = vpow.pop %v521
        %v523 = vadd.f32 %v522, 1.0
        %v524 = vrcp.pop %v523
        %v525 = vmul.f32 %v523, %v524
        %v526 = vsub.f32 1.0, %v525
        %v527 = vmul.f32 %v524, %v526
        %v528 = vadd.f32 %v524, %v527
        %vm529 = vweird.f32 %v523
        %vm530 = vweird.f32 %v524
        %vm531 = vmor %vm529, %vm530
        %v532 = vsel %vm531, %v524, %v528
        %v533 = vand.u32 2147483647, %v523
        %vm534 = vcmp.eq.f32.partialorder %v533, 8.507059e+37
        %v535 = vand.u32 %v523, 2147483648
        %v536 = vor.u32 1.1754944e-38, %v535
        %v537 = vsel %vm534, %v536, %v532
        %v538 = vmul.f32 1.0, %v537
        %v539 = vadd.f32 %v421, %v503
        %v540 = vxor.u32 %v539, 2147483648
        %v541 = vmul.f32 %v540, 1.442695
        %v542 = vpow.pop %v541
        %v543 = vadd.f32 %v542, 1.0
        %v544 = vrcp.pop %v543
        %v545 = vmul.f32 %v543, %v544
        %v546 = vsub.f32 1.0, %v545
        %v547 = vmul.f32 %v544, %v546
        %v548 = vadd.f32 %v544, %v547
        %vm549 = vweird.f32 %v543
        %vm550 = vweird.f32 %v544
        %vm551 = vmor %vm549, %vm550
        %v552 = vsel %vm551, %v544, %v548
        %v553 = vand.u32 2147483647, %v543
        %vm554 = vcmp.eq.f32.partialorder %v553, 8.507059e+37
        %v555 = vand.u32 %v543, 2147483648
        %v556 = vor.u32 1.1754944e-38, %v555
        %v557 = vsel %vm554, %v556, %v552
        %v558 = vmul.f32 1.0, %v557
        %v559 = vld [vmem:[%s5] sm:$0x1]
        %v561 = vperm.slane %v559, 0
        %v563 = vadd.f32 %v516, %v561
        %v564 = vmul.f32 %v538, %v563
        %v565 = vadd.f32 %v434, %v564
        %v566 = vtanh.pop %v565
        %v567 = vsub.f32 %v342, %v566
        %v568 = vmul.f32 %v558, %v567
        %v569 = vadd.f32 %v566, %v568
        %570 = vst.msk [vmem:[%s340] sm:$0xff] %vm394, %v569
        %s571 = sand.u32 %s171, 1
        %s572 = scalar_lea.sflag [#allocation4], %s571
        %s573 = sand.u32 %s171, 1
        %s574 = smul.addr %s573, 8
        %s575 = scalar_lea.vmem [#allocation10], %s574
        // Predicated region
        $region61: #{_mpnn_update_packed.1} parent=43 // pred_check
          %p576 = pneg %p181
        $region62: #{_mpnn_update_packed.1} parent=43 // pred_check_branch
          %578 = sbr.rel (%p576) target = $region64
        $region63: #{_mpnn_update_packed.1} parent=43 // pred_region
          %580 = vsyncadd %s572, 0
          %s581 = smul.addr %s27, 8
          %s582 = scalar_lea.hbm %s6, %s581
          %s584 = sshll.u32 %s575, 4
          %s585 = int_to_ptr.vmem [resolvable:$true] %s584
          %s586 = sshll.u32 %s582, 4
          %s587 = int_to_ptr.hbm [resolvable:$true] %s586
          %589 = dma.vmem_to_hbm [thread:$0]  %s585, 128, %s587, %s572
        $region64: #{_mpnn_update_packed.1} parent=43 // pred_fallthru
          _
      $region44: #{_mpnn_update_packed.1} parent=5 // pred_fallthru
        _
      %p590 = scmp.le.s32.totalorder 2, %s22
      // Predicated region
      $region65: #{_mpnn_update_packed.1} parent=5 // pred_check
        %p591 = pneg %p590
      $region66: #{_mpnn_update_packed.1} parent=5 // pred_check_branch
        %593 = sbr.rel (%p591) target = $region68
      $region67: #{_mpnn_update_packed.1} parent=5 // pred_region
        %s594 = ssub.s32 %s22, 2
        // Predicated region
        $region69: #{_mpnn_update_packed.1} parent=67 // pred_check
          %p595 = pneg %p187
        $region70: #{_mpnn_update_packed.1} parent=67 // pred_check_branch
          %597 = sbr.rel (%p595) target = $region72
        $region71: #{_mpnn_update_packed.1} parent=67 // pred_region
          %s598 = sand.u32 %s172, 1
          %s599 = scalar_lea.sflag [#allocation4], %s598
          %s600 = sand.u32 %s172, 1
          %s601 = smul.addr %s600, 8
          %s602 = scalar_lea.vmem [#allocation10], %s601
          %604 = dma.done %s599, 128
        $region72: #{_mpnn_update_packed.1} parent=67 // pred_fallthru
          _
      $region68: #{_mpnn_update_packed.1} parent=5 // pred_fallthru
        _
    $region6: #{_mpnn_update_packed.1} parent=1 // loop_footer
      %s26 = sadd.s32 1, %s22
    $region7: #{_mpnn_update_packed.1} parent=1 // loop_footer_branch
      %21 = sbr.rel target = $region3
    $region8: #{_mpnn_update_packed.1} parent=1 // loop_exit
      _
    %605 = vsyncpa [#allocation3], 1
    %s606 = scalar_lea.sflag [#allocation3], 1
    %607 = vsyncpa %s606, 1
    %608 = vsyncpa [#allocation6], 1
    %s609 = scalar_lea.sflag [#allocation6], 1
    %610 = vsyncpa %s609, 1
    %611 = vsyncpa [#allocation9], 1
    %612 = vsyncpa [#allocation4], 1
    %s613 = scalar_lea.sflag [#allocation4], 1
    %614 = vsyncpa %s613, 1

// kernel: _mpnn_update_packed.1
$region0: #{_mpnn_update_packed.1}
  #allocation0 [shape = 'u32[]', space=smem, size = 0x4, offset = 0x4, fixed_abs, tag = 'smem constant byte address 0x4 - core index']
  #allocation1 [shape = 'u32[72,128]{1,0:T(1,128)}', space=vmem, size = 0x9000, scoped, tag = 'internal scratch']
  %s0 = inlined_call_operand.hbm [shape: f32[16,32], index: 0, kind: input, shape index: {}]
  %s1 = inlined_call_operand.hbm [shape: f32[16,32], index: 1, kind: input, shape index: {}]
  %s2 = inlined_call_operand.hbm [shape: bf16[32,384], index: 2, kind: input, shape index: {}]
  %s3 = inlined_call_operand.hbm [shape: bf16[32,384], index: 3, kind: input, shape index: {}]
  %s4 = inlined_call_operand.vmem [shape: f32[1,384], index: 4, kind: input, shape index: {}]
  %s5 = inlined_call_operand.vmem [shape: f32[1,128], index: 5, kind: input, shape index: {}]
  %s6 = inlined_call_operand.hbm [shape: f32[16,32], index: 6, kind: output, shape index: {}]
  %s7 = sld [smem:[#allocation0]]
  $region73: #{_mpnn_update_packed.1} parent=0
    _
  %s9 = ssub.s32 1, %s7
  %s10 = scalar_select 0, %s9, %s7
  $region1: #{_mpnn_update_packed.1} parent=0
    #allocation2 [shape = 'u8[8192]{0}', space=vmem, size = 0x2000, scoped, tag = 'input window, operand 0']
    #allocation3 [shape = 's32[2]{0}', space=sflag, size = 0x8, scoped, tag = 'scoped memory for _mpnn_update_packed.1']
    #allocation4 [shape = 's32[2]{0}', space=sflag, size = 0x8, scoped, tag = 'scoped memory for _mpnn_update_packed.1']
    #allocation5 [shape = 'u8[8192]{0}', space=vmem, size = 0x2000, scoped, tag = 'input window, operand 1']
    #allocation6 [shape = 's32[2]{0}', space=sflag, size = 0x8, scoped, tag = 'scoped memory for _mpnn_update_packed.1']
    #allocation7 [shape = 'u8[24576]{0}', space=vmem, size = 0x6000, scoped, tag = 'input window, operand 2, single buffered']
    #allocation8 [shape = 'u8[24576]{0}', space=vmem, size = 0x6000, scoped, tag = 'input window, operand 3, single buffered']
    #allocation9 [shape = 's32[1]{0}', space=sflag, size = 0x4, scoped, tag = 'scoped memory for _mpnn_update_packed.1']
    #allocation10 [shape = 'u8[8192]{0}', space=vmem, size = 0x2000, scoped, tag = 'output window, operand 0']
    %11 = vsyncpa [#allocation3], 0
    %s12 = scalar_lea.sflag [#allocation3], 1
    %13 = vsyncpa %s12, 0
    %14 = vsyncpa [#allocation6], 0
    %s15 = scalar_lea.sflag [#allocation6], 1
    %16 = vsyncpa %s15, 0
    %17 = vsyncpa [#allocation9], 0
    %18 = vsyncpa [#allocation4], 0
    %s19 = scalar_lea.sflag [#allocation4], 1
    %20 = vsyncpa %s19, 0
    loop: start=0, step=1, limit=4
    $region2: #{_mpnn_update_packed.1} parent=1 // loop_pre_header
      _
    $region3: #{_mpnn_update_packed.1} parent=1 // loop_header
      %s22 = sphi 0, %s26
      %p23 = scmp.ge.s32.totalorder %s22, 4
      %s32 = sphi 0, %s34
      %s35 = sphi 0, %s32
      %s36 = sphi 0, %s35
      %s52 = sphi 0, %s36
      %s58 = sphi 0, %s60
      %s61 = sphi 0, %s58
      %s62 = sphi 0, %s61
      %s78 = sphi 0, %s62
      %s82 = sphi 0, %s82
      %s84 = sphi 0, %s82
      %s85 = sphi 0, %s84
      %s99 = sphi 0, %s85
      %s103 = sphi 0, %s103
      %s105 = sphi 0, %s103
      %s106 = sphi 0, %s105
      %s120 = sphi 0, %s106
      %s124 = sphi 0, %s124
      %s126 = sphi 0, %s124
      %s127 = sphi 0, %s126
      %s141 = sphi 0, %s127
      %s145 = sphi 0, %s145
      %s147 = sphi 0, %s145
      %s148 = sphi 0, %s147
      %s162 = sphi 0, %s148
      %s168 = sphi 0, %s170
      %s171 = sphi 0, %s168
      %s172 = sphi 0, %s171
      %s188 = sphi 0, %s172
    $region4: #{_mpnn_update_packed.1} parent=1 // loop_header_branch
      %25 = sbr.rel (%p23) target = $region8
    $region5: #{_mpnn_update_packed.1} parent=1 // loop_body
      %s27 = ssub.s32 %s22, 1
      %s28 = ssub.s32 %s22, 2
      %s29 = sadd.s32 %s22, 1
      %s30 = ssub.s32 %s22, %s29
      %p31 = scmp.eq.s32.totalorder %s30, 0
      %s33 = sadd.s32 %s32, 1
      %s34 = scalar_select %p31, %s32, %s33
      %p37 = pneg %p31
      %p38 = scmp.eq.s32.totalorder %s22, 1
      %p39 = por %p37, %p38
      %p40 = scmp.ne.s32.totalorder %s32, %s35
      %p41 = scmp.eq.s32.totalorder %s22, 0
      %p42 = por %p40, %p41
      %p43 = scmp.ne.s32.totalorder %s32, %s35
      %p44 = scmp.eq.s32.totalorder %s27, 1
      %p45 = por %p43, %p44
      %p46 = scmp.ne.s32.totalorder %s35, %s36
      %p47 = scmp.eq.s32.totalorder %s27, 0
      %p48 = por %p46, %p47
      %p49 = scmp.ne.s32.totalorder %s35, %s36
      %p50 = scmp.eq.s32.totalorder %s28, 1
      %p51 = por %p49, %p50
      %p53 = scmp.ne.s32.totalorder %s36, %s52
      %p54 = scmp.eq.s32.totalorder %s28, 0
      %p55 = por %p53, %p54
      %s56 = ssub.s32 %s22, %s29
      %p57 = scmp.eq.s32.totalorder %s56, 0
      %s59 = sadd.s32 %s58, 1
      %s60 = scalar_select %p57, %s58, %s59
      %p63 = pneg %p57
      %p64 = scmp.eq.s32.totalorder %s22, 1
      %p65 = por %p63, %p64
      %p66 = scmp.ne.s32.totalorder %s58, %s61
      %p67 = scmp.eq.s32.totalorder %s22, 0
      %p68 = por %p66, %p67
      %p69 = scmp.ne.s32.totalorder %s58, %s61
      %p70 = scmp.eq.s32.totalorder %s27, 1
      %p71 = por %p69, %p70
      %p72 = scmp.ne.s32.totalorder %s61, %s62
      %p73 = scmp.eq.s32.totalorder %s27, 0
      %p74 = por %p72, %p73
      %p75 = scmp.ne.s32.totalorder %s61, %s62
      %p76 = scmp.eq.s32.totalorder %s28, 1
      %p77 = por %p75, %p76
      %p79 = scmp.ne.s32.totalorder %s62, %s78
      %p80 = scmp.eq.s32.totalorder %s28, 0
      %p81 = por %p79, %p80
      %s83 = sadd.s32 %s82, 1
      %p86 = scmp.eq.s32.totalorder %s22, 1
      %p87 = scmp.ne.s32.totalorder %s82, %s84
      %p88 = scmp.eq.s32.totalorder %s22, 0
      %p89 = por %p87, %p88
      %p90 = scmp.ne.s32.totalorder %s82, %s84
      %p91 = scmp.eq.s32.totalorder %s27, 1
      %p92 = por %p90, %p91
      %p93 = scmp.ne.s32.totalorder %s84, %s85
      %p94 = scmp.eq.s32.totalorder %s27, 0
      %p95 = por %p93, %p94
      %p96 = scmp.ne.s32.totalorder %s84, %s85
      %p97 = scmp.eq.s32.totalorder %s28, 1
      %p98 = por %p96, %p97
      %p100 = scmp.ne.s32.totalorder %s85, %s99
      %p101 = scmp.eq.s32.totalorder %s28, 0
      %p102 = por %p100, %p101
      %s104 = sadd.s32 %s103, 1
      %p107 = scmp.eq.s32.totalorder %s22, 1
      %p108 = scmp.ne.s32.totalorder %s103, %s105
      %p109 = scmp.eq.s32.totalorder %s22, 0
      %p110 = por %p108, %p109
      %p111 = scmp.ne.s32.totalorder %s103, %s105
      %p112 = scmp.eq.s32.totalorder %s27, 1
      %p113 = por %p111, %p112
      %p114 = scmp.ne.s32.totalorder %s105, %s106
      %p115 = scmp.eq.s32.totalorder %s27, 0
      %p116 = por %p114, %p115
      %p117 = scmp.ne.s32.totalorder %s105, %s106
      %p118 = scmp.eq.s32.totalorder %s28, 1
      %p119 = por %p117, %p118
      %p121 = scmp.ne.s32.totalorder %s106, %s120
      %p122 = scmp.eq.s32.totalorder %s28, 0
      %p123 = por %p121, %p122
      %s125 = sadd.s32 %s124, 1
      %p128 = scmp.eq.s32.totalorder %s22, 1
      %p129 = scmp.ne.s32.totalorder %s124, %s126
      %p130 = scmp.eq.s32.totalorder %s22, 0
      %p131 = por %p129, %p130
      %p132 = scmp.ne.s32.totalorder %s124, %s126
      %p133 = scmp.eq.s32.totalorder %s27, 1
      %p134 = por %p132, %p133
      %p135 = scmp.ne.s32.totalorder %s126, %s127
      %p136 = scmp.eq.s32.totalorder %s27, 0
      %p137 = por %p135, %p136
      %p138 = scmp.ne.s32.totalorder %s126, %s127
      %p139 = scmp.eq.s32.totalorder %s28, 1
      %p140 = por %p138, %p139
      %p142 = scmp.ne.s32.totalorder %s127, %s141
      %p143 = scmp.eq.s32.totalorder %s28, 0
      %p144 = por %p142, %p143
      %s146 = sadd.s32 %s145, 1
      %p149 = scmp.eq.s32.totalorder %s22, 1
      %p150 = scmp.ne.s32.totalorder %s145, %s147
      %p151 = scmp.eq.s32.totalorder %s22, 0
      %p152 = por %p150, %p151
      %p153 = scmp.ne.s32.totalorder %s145, %s147
      %p154 = scmp.eq.s32.totalorder %s27, 1
      %p155 = por %p153, %p154
      %p156 = scmp.ne.s32.totalorder %s147, %s148
      %p157 = scmp.eq.s32.totalorder %s27, 0
      %p158 = por %p156, %p157
      %p159 = scmp.ne.s32.totalorder %s147, %s148
      %p160 = scmp.eq.s32.totalorder %s28, 1
      %p161 = por %p159, %p160
      %p163 = scmp.ne.s32.totalorder %s148, %s162
      %p164 = scmp.eq.s32.totalorder %s28, 0
      %p165 = por %p163, %p164
      %s166 = ssub.s32 %s22, %s29
      %p167 = scmp.eq.s32.totalorder %s166, 0
      %s169 = sadd.s32 %s168, 1
      %s170 = scalar_select %p167, %s168, %s169
      %p173 = pneg %p167
      %p174 = scmp.eq.s32.totalorder %s22, 1
      %p175 = por %p173, %p174
      %p176 = scmp.ne.s32.totalorder %s168, %s171
      %p177 = scmp.eq.s32.totalorder %s22, 0
      %p178 = por %p176, %p177
      %p179 = scmp.ne.s32.totalorder %s168, %s171
      %p180 = scmp.eq.s32.totalorder %s27, 1
      %p181 = por %p179, %p180
      %p182 = scmp.ne.s32.totalorder %s171, %s172
      %p183 = scmp.eq.s32.totalorder %s27, 0
      %p184 = por %p182, %p183
      %p185 = scmp.ne.s32.totalorder %s171, %s172
      %p186 = scmp.eq.s32.totalorder %s28, 1
      %p187 = por %p185, %p186
      %p189 = scmp.ne.s32.totalorder %s172, %s188
      %p190 = scmp.eq.s32.totalorder %s28, 0
      %p191 = por %p189, %p190
      %p192 = scmp.le.s32.totalorder 1, %s22
      %p193 = scmp.lt.s32.totalorder %s22, 3
      %p194 = pnand %p192, %p193
      %p195 = pneg %p194
      // Predicated region
      $region9: #{_mpnn_update_packed.1} parent=5 // pred_check
        _
      $region10: #{_mpnn_update_packed.1} parent=5 // pred_check_branch
        %197 = sbr.rel (%p194) target = $region12
      $region11: #{_mpnn_update_packed.1} parent=5 // pred_region
        %s198 = ssub.s32 %s22, 1
        // Predicated region
        $region13: #{_mpnn_update_packed.1} parent=11 // pred_check
          %p199 = pneg %p95
        $region14: #{_mpnn_update_packed.1} parent=11 // pred_check_branch
          %201 = sbr.rel (%p199) target = $region16
        $region15: #{_mpnn_update_packed.1} parent=11 // pred_region
          %203 = vsyncadd [#allocation6], 0
          %s204 = sshll.u32 %s2, 4
          %s205 = int_to_ptr.hbm [resolvable:$true] %s204
          %s206 = sshll.u32 [#allocation7], 4
          %s207 = int_to_ptr.vmem [resolvable:$true] %s206
          %212 = dma.hbm_to_vmem [thread:$0]  %s205, 768, %s207, [#allocation6], 192, 192, 12
        $region16: #{_mpnn_update_packed.1} parent=11 // pred_fallthru
          _
        // Predicated region
        $region17: #{_mpnn_update_packed.1} parent=11 // pred_check
          %p213 = pneg %p116
        $region18: #{_mpnn_update_packed.1} parent=11 // pred_check_branch
          %215 = sbr.rel (%p213) target = $region20
        $region19: #{_mpnn_update_packed.1} parent=11 // pred_region
          %217 = vsyncadd [#allocation9], 0
          %s218 = sshll.u32 %s3, 4
          %s219 = int_to_ptr.hbm [resolvable:$true] %s218
          %s220 = sshll.u32 [#allocation8], 4
          %s221 = int_to_ptr.vmem [resolvable:$true] %s220
          %226 = dma.hbm_to_vmem [thread:$0]  %s219, 768, %s221, [#allocation9], 192, 192, 12
        $region20: #{_mpnn_update_packed.1} parent=11 // pred_fallthru
          _
        // Predicated region
        $region21: #{_mpnn_update_packed.1} parent=11 // pred_check
          %p227 = pneg %p137
        $region22: #{_mpnn_update_packed.1} parent=11 // pred_check_branch
          %229 = sbr.rel (%p227) target = $region24
        $region23: #{_mpnn_update_packed.1} parent=11 // pred_region
          _
        $region24: #{_mpnn_update_packed.1} parent=11 // pred_fallthru
          _
        // Predicated region
        $region25: #{_mpnn_update_packed.1} parent=11 // pred_check
          %p230 = pneg %p158
        $region26: #{_mpnn_update_packed.1} parent=11 // pred_check_branch
          %232 = sbr.rel (%p230) target = $region28
        $region27: #{_mpnn_update_packed.1} parent=11 // pred_region
          _
        $region28: #{_mpnn_update_packed.1} parent=11 // pred_fallthru
          _
      $region12: #{_mpnn_update_packed.1} parent=5 // pred_fallthru
        _
      %p233 = scmp.lt.s32.totalorder %s22, 2
      // Predicated region
      $region29: #{_mpnn_update_packed.1} parent=5 // pred_check
        %p234 = pneg %p233
      $region30: #{_mpnn_update_packed.1} parent=5 // pred_check_branch
        %236 = sbr.rel (%p234) target = $region32
      $region31: #{_mpnn_update_packed.1} parent=5 // pred_region
        // Predicated region
        $region33: #{_mpnn_update_packed.1} parent=31 // pred_check
          %p237 = pneg %p42
        $region34: #{_mpnn_update_packed.1} parent=31 // pred_check_branch
          %239 = sbr.rel (%p237) target = $region36
        $region35: #{_mpnn_update_packed.1} parent=31 // pred_region
          %s240 = sand.u32 %s32, 1
          %s241 = scalar_lea.sflag [#allocation3], %s240
          %s242 = sand.u32 %s32, 1
          %s243 = smul.addr %s242, 8
          %s244 = scalar_lea.vmem [#allocation2], %s243
          %246 = vsyncadd %s241, 0
          %s247 = smul.addr %s22, 8
          %s248 = scalar_lea.hbm %s0, %s247
          %s250 = sshll.u32 %s248, 4
          %s251 = int_to_ptr.hbm [resolvable:$true] %s250
          %s252 = sshll.u32 %s244, 4
          %s253 = int_to_ptr.vmem [resolvable:$true] %s252
          %255 = dma.hbm_to_vmem [thread:$0]  %s251, 128, %s253, %s241
        $region36: #{_mpnn_update_packed.1} parent=31 // pred_fallthru
          _
        // Predicated region
        $region37: #{_mpnn_update_packed.1} parent=31 // pred_check
          %p256 = pneg %p68
        $region38: #{_mpnn_update_packed.1} parent=31 // pred_check_branch
          %258 = sbr.rel (%p256) target = $region40
        $region39: #{_mpnn_update_packed.1} parent=31 // pred_region
          %s259 = sand.u32 %s22, 1
          %s260 = scalar_lea.sflag [#allocation6], %s259
          %s261 = sand.u32 %s58, 1
          %s262 = smul.addr %s261, 8
          %s263 = scalar_lea.vmem [#allocation5], %s262
          %265 = vsyncadd %s260, 0
          %s266 = smul.addr %s22, 8
          %s267 = scalar_lea.hbm %s1, %s266
          %s269 = sshll.u32 %s267, 4
          %s270 = int_to_ptr.hbm [resolvable:$true] %s269
          %s271 = sshll.u32 %s263, 4
          %s272 = int_to_ptr.vmem [resolvable:$true] %s271
          %274 = dma.hbm_to_vmem [thread:$0]  %s270, 128, %s272, %s260
        $region40: #{_mpnn_update_packed.1} parent=31 // pred_fallthru
          _
      $region32: #{_mpnn_update_packed.1} parent=5 // pred_fallthru
        _
      %p275 = scmp.le.s32.totalorder 1, %s22
      %p276 = scmp.lt.s32.totalorder %s22, 3
      %p277 = pnand %p275, %p276
      %p278 = pneg %p277
      // Predicated region
      $region41: #{_mpnn_update_packed.1} parent=5 // pred_check
        _
      $region42: #{_mpnn_update_packed.1} parent=5 // pred_check_branch
        %280 = sbr.rel (%p277) target = $region44
      $region43: #{_mpnn_update_packed.1} parent=5 // pred_region
        %s281 = ssub.s32 %s22, 1
        %s282 = sand.u32 %s35, 1
        %s283 = scalar_lea.sflag [#allocation3], %s282
        %s284 = sand.u32 %s35, 1
        %s285 = smul.addr %s284, 8
        %s286 = scalar_lea.vmem [#allocation2], %s285
        // Predicated region
        $region45: #{_mpnn_update_packed.1} parent=43 // pred_check
          %p287 = pneg %p48
        $region46: #{_mpnn_update_packed.1} parent=43 // pred_check_branch
          %289 = sbr.rel (%p287) target = $region48
        $region47: #{_mpnn_update_packed.1} parent=43 // pred_region
          %291 = dma.done %s283, 128
        $region48: #{_mpnn_update_packed.1} parent=43 // pred_fallthru
          _
        %s292 = sand.u32 %s27, 1
        %s293 = scalar_lea.sflag [#allocation6], %s292
        %s294 = sand.u32 %s61, 1
        %s295 = smul.addr %s294, 8
        %s296 = scalar_lea.vmem [#allocation5], %s295
        // Predicated region
        $region49: #{_mpnn_update_packed.1} parent=43 // pred_check
          %p297 = pneg %p74
        $region50: #{_mpnn_update_packed.1} parent=43 // pred_check_branch
          %299 = sbr.rel (%p297) target = $region52
        $region51: #{_mpnn_update_packed.1} parent=43 // pred_region
          %301 = dma.done %s293, 128
        $region52: #{_mpnn_update_packed.1} parent=43 // pred_fallthru
          _
        // Predicated region
        $region53: #{_mpnn_update_packed.1} parent=43 // pred_check
          %p302 = pneg %p95
        $region54: #{_mpnn_update_packed.1} parent=43 // pred_check_branch
          %304 = sbr.rel (%p302) target = $region56
        $region55: #{_mpnn_update_packed.1} parent=43 // pred_region
          %306 = dma.done [#allocation6], 768
        $region56: #{_mpnn_update_packed.1} parent=43 // pred_fallthru
          _
        // Predicated region
        $region57: #{_mpnn_update_packed.1} parent=43 // pred_check
          %p307 = pneg %p116
        $region58: #{_mpnn_update_packed.1} parent=43 // pred_check_branch
          %309 = sbr.rel (%p307) target = $region60
        $region59: #{_mpnn_update_packed.1} parent=43 // pred_region
          %311 = dma.done [#allocation9], 768
        $region60: #{_mpnn_update_packed.1} parent=43 // pred_fallthru
          _
        %s312 = sand.u32 %s35, 1
        %s313 = scalar_lea.sflag [#allocation3], %s312
        %s314 = sand.u32 %s35, 1
        %s315 = smul.addr %s314, 8
        %s316 = scalar_lea.vmem [#allocation2], %s315
        %p317 = pneg %p48
        %p318 = pneg %p45
        %s319 = sand.u32 %s27, 1
        %s320 = scalar_lea.sflag [#allocation6], %s319
        %s321 = sand.u32 %s61, 1
        %s322 = smul.addr %s321, 8
        %s323 = scalar_lea.vmem [#allocation5], %s322
        %p324 = pneg %p74
        %p325 = pneg %p71
        %p326 = pneg %p95
        %p327 = pneg %p92
        %p328 = pneg %p116
        %p329 = pneg %p113
        %p330 = pneg %p137
        %p331 = pneg %p134
        %p332 = pneg %p158
        %p333 = pneg %p155
        %p334 = pneg %p184
        %p335 = pneg %p181
        %s336 = sand.u32 %s171, 1
        %s337 = scalar_lea.sflag [#allocation4], %s336
        %s338 = sand.u32 %s171, 1
        %s339 = smul.addr %s338, 8
        %s340 = scalar_lea.vmem [#allocation10], %s339
        %v342 = vld [vmem:[%s296] sm:$0xff]
        %v343 = vpack.c.bf16 %v342, %v342
        %v344 = vld [vmem:[%s286] sm:$0xff]
        %v345 = vpack.c.bf16 %v344, %v344
        %v346 = vld [vmem:[#allocation7] sm:$0xff]
        %v347 = vld [vmem:[#allocation7 + $0x8] sm:$0xf]
        %v348 = vld [vmem:[#allocation7 + $0xc] sm:$0xff]
        %v349 = vld [vmem:[#allocation7 + $0x14] sm:$0xf]
        %v350 = vld [vmem:[#allocation7 + $0x18] sm:$0xff]
        %v351 = vld [vmem:[#allocation7 + $0x20] sm:$0xf]
        %v352 = vld [vmem:[#allocation7 + $0x24] sm:$0xff]
        %v353 = vld [vmem:[#allocation7 + $0x2c] sm:$0xf]
        %v354 = vld [vmem:[%s4] sm:$0x7]
        %v356 = vperm.slane %v354, 0
        %v357 = vperm.slane %v354, 1
        %v358 = vperm.slane %v354, 2
        %v370 = vunpack.c.l.b16 %v346
        %v371 = vunpack.c.h.b16 %v346
        %v372 = vunpack.c.l.b16 %v347
        %v373 = vunpack.c.l.b16 %v348
        %v374 = vunpack.c.h.b16 %v348
        %v375 = vunpack.c.l.b16 %v349
        %v376 = vunpack.c.l.b16 %v350
        %v377 = vunpack.c.h.b16 %v350
        %v378 = vunpack.c.l.b16 %v351
        %v379 = vunpack.c.l.b16 %v352
        %v380 = vunpack.c.h.b16 %v352
        %v381 = vunpack.c.l.b16 %v353
        %v382 = vpack.c.b16 %v373, %v370
        %v383 = vpack.c.b16 %v374, %v371
        %v384 = vpack.c.b16 %v375, %v372
        %v385 = vpack.c.b16 %v379, %v376
        %v386 = vpack.c.b16 %v380, %v377
        %v387 = vpack.c.b16 %v381, %v378
        %vm394 = vcmask 261120
        %v396 = vsel %vm394, %v345, 0
        %398 = vmatpush.bf16.msra.mxu0 0
        %399 = vmatpush.bf16.msra.mxu0 0
        %400 = vmatpush.bf16.msra.mxu0 0
        %401 = vmatpush.bf16.msra.mxu0 0
        %402 = vmatpush.bf16.msra.mxu0 0
        %403 = vmatpush.bf16.msra.mxu0 0
        %404 = vmatpush.bf16.msra.mxu0 %v385
        %405 = vmatpush.bf16.msra.mxu0 %v382
        %406 = vmatmul.bf16.gmra.mxu0 %v396
        %v407 = vpop.f32.mrf.mxu0
        %v408 = vadd.f32 %v356, %v407
        %v409 = vpop.f32.mrf.mxu0
        %410 = vdwg.mxu0
        %411 = vmatpush.bf16.msra.mxu0 0
        %412 = vmatpush.bf16.msra.mxu0 0
        %413 = vmatpush.bf16.msra.mxu0 0
        %414 = vmatpush.bf16.msra.mxu0 0
        %415 = vmatpush.bf16.msra.mxu0 0
        %416 = vmatpush.bf16.msra.mxu0 0
        %417 = vmatpush.bf16.msra.mxu0 %v386
        %418 = vmatpush.bf16.msra.mxu0 %v383
        %419 = vmatmul.bf16.gmra.mxu0 %v396
        %v420 = vpop.f32.mrf.mxu0
        %v421 = vadd.f32 %v357, %v420
        %v422 = vpop.f32.mrf.mxu0
        %423 = vdwg.mxu0
        %424 = vmatpush.bf16.msra.mxu0 0
        %425 = vmatpush.bf16.msra.mxu0 0
        %426 = vmatpush.bf16.msra.mxu0 0
        %427 = vmatpush.bf16.msra.mxu0 0
        %428 = vmatpush.bf16.msra.mxu0 0
        %429 = vmatpush.bf16.msra.mxu0 0
        %430 = vmatpush.bf16.msra.mxu0 %v387
        %431 = vmatpush.bf16.msra.mxu0 %v384
        %432 = vmatmul.bf16.gmra.mxu0 %v396
        %v433 = vpop.f32.mrf.mxu0
        %v434 = vadd.f32 %v358, %v433
        %v435 = vpop.f32.mrf.mxu0
        %436 = vdwg.mxu0
        %v437 = vld [vmem:[#allocation8] sm:$0xff]
        %v438 = vld [vmem:[#allocation8 + $0x8] sm:$0xf]
        %v439 = vld [vmem:[#allocation8 + $0xc] sm:$0xff]
        %v440 = vld [vmem:[#allocation8 + $0x14] sm:$0xf]
        %v441 = vld [vmem:[#allocation8 + $0x18] sm:$0xff]
        %v442 = vld [vmem:[#allocation8 + $0x20] sm:$0xf]
        %v443 = vld [vmem:[#allocation8 + $0x24] sm:$0xff]
        %v444 = vld [vmem:[#allocation8 + $0x2c] sm:$0xf]
        %v453 = vunpack.c.l.b16 %v437
        %v454 = vunpack.c.h.b16 %v437
        %v455 = vunpack.c.l.b16 %v438
        %v456 = vunpack.c.l.b16 %v439
        %v457 = vunpack.c.h.b16 %v439
        %v458 = vunpack.c.l.b16 %v440
        %v459 = vunpack.c.l.b16 %v441
        %v460 = vunpack.c.h.b16 %v441
        %v461 = vunpack.c.l.b16 %v442
        %v462 = vunpack.c.l.b16 %v443
        %v463 = vunpack.c.h.b16 %v443
        %v464 = vunpack.c.l.b16 %v444
        %v465 = vpack.c.b16 %v456, %v453
        %v466 = vpack.c.b16 %v457, %v454
        %v467 = vpack.c.b16 %v458, %v455
        %v468 = vpack.c.b16 %v462, %v459
        %v469 = vpack.c.b16 %v463, %v460
        %v470 = vpack.c.b16 %v464, %v461
        %v478 = vsel %vm394, %v343, 0
        %480 = vmatpush.bf16.msra.mxu0 0
        %481 = vmatpush.bf16.msra.mxu0 0
        %482 = vmatpush.bf16.msra.mxu0 0
        %483 = vmatpush.bf16.msra.mxu0 0
        %484 = vmatpush.bf16.msra.mxu0 0
        %485 = vmatpush.bf16.msra.mxu0 0
        %486 = vmatpush.bf16.msra.mxu0 %v468
        %487 = vmatpush.bf16.msra.mxu0 %v465
        %488 = vmatmul.bf16.gmra.mxu0 %v478
        %v489 = vpop.f32.mrf.mxu0
        %v490 = vadd.f32 0.0, %v489
        %v491 = vpop.f32.mrf.mxu0
        %492 = vdwg.mxu0
        %493 = vmatpush.bf16.msra.mxu0 0
        %494 = vmatpush.bf16.msra.mxu0 0
        %495 = vmatpush.bf16.msra.mxu0 0
        %496 = vmatpush.bf16.msra.mxu0 0
        %497 = vmatpush.bf16.msra.mxu0 0
        %498 = vmatpush.bf16.msra.mxu0 0
        %499 = vmatpush.bf16.msra.mxu0 %v469
        %500 = vmatpush.bf16.msra.mxu0 %v466
        %501 = vmatmul.bf16.gmra.mxu0 %v478
        %v502 = vpop.f32.mrf.mxu0
        %v503 = vadd.f32 0.0, %v502
        %v504 = vpop.f32.mrf.mxu0
        %505 = vdwg.mxu0
        %506 = vmatpush.bf16.msra.mxu0 0
        %507 = vmatpush.bf16.msra.mxu0 0
        %508 = vmatpush.bf16.msra.mxu0 0
        %509 = vmatpush.bf16.msra.mxu0 0
        %510 = vmatpush.bf16.msra.mxu0 0
        %511 = vmatpush.bf16.msra.mxu0 0
        %512 = vmatpush.bf16.msra.mxu0 %v470
        %513 = vmatpush.bf16.msra.mxu0 %v467
        %514 = vmatmul.bf16.gmra.mxu0 %v478
        %v515 = vpop.f32.mrf.mxu0
        %v516 = vadd.f32 0.0, %v515
        %v517 = vpop.f32.mrf.mxu0
        %518 = vdwg.mxu0
        %v519 = vadd.f32 %v408, %v490
        %v520 = vxor.u32 %v519, 2147483648
        %v521 = vmul.f32 %v520, 1.442695
        %v522 = vpow.pop %v521
        %v523 = vadd.f32 %v522, 1.0
        %v524 = vrcp.pop %v523
        %v525 = vmul.f32 %v523, %v524
        %v526 = vsub.f32 1.0, %v525
        %v527 = vmul.f32 %v524, %v526
        %v528 = vadd.f32 %v524, %v527
        %vm529 = vweird.f32 %v523
        %vm530 = vweird.f32 %v524
        %vm531 = vmor %vm529, %vm530
        %v532 = vsel %vm531, %v524, %v528
        %v533 = vand.u32 2147483647, %v523
        %vm534 = vcmp.eq.f32.partialorder %v533, 8.507059e+37
        %v535 = vand.u32 %v523, 2147483648
        %v536 = vor.u32 1.1754944e-38, %v535
        %v537 = vsel %vm534, %v536, %v532
        %v538 = vmul.f32 1.0, %v537
        %v539 = vadd.f32 %v421, %v503
        %v540 = vxor.u32 %v539, 2147483648
        %v541 = vmul.f32 %v540, 1.442695
        %v542 = vpow.pop %v541
        %v543 = vadd.f32 %v542, 1.0
        %v544 = vrcp.pop %v543
        %v545 = vmul.f32 %v543, %v544
        %v546 = vsub.f32 1.0, %v545
        %v547 = vmul.f32 %v544, %v546
        %v548 = vadd.f32 %v544, %v547
        %vm549 = vweird.f32 %v543
        %vm550 = vweird.f32 %v544
        %vm551 = vmor %vm549, %vm550
        %v552 = vsel %vm551, %v544, %v548
        %v553 = vand.u32 2147483647, %v543
        %vm554 = vcmp.eq.f32.partialorder %v553, 8.507059e+37
        %v555 = vand.u32 %v543, 2147483648
        %v556 = vor.u32 1.1754944e-38, %v555
        %v557 = vsel %vm554, %v556, %v552
        %v558 = vmul.f32 1.0, %v557
        %v559 = vld [vmem:[%s5] sm:$0x1]
        %v561 = vperm.slane %v559, 0
        %v563 = vadd.f32 %v516, %v561
        %v564 = vmul.f32 %v538, %v563
        %v565 = vadd.f32 %v434, %v564
        %v566 = vtanh.pop %v565
        %v567 = vsub.f32 %v342, %v566
        %v568 = vmul.f32 %v558, %v567
        %v569 = vadd.f32 %v566, %v568
        %570 = vst.msk [vmem:[%s340] sm:$0xff] %vm394, %v569
        %s571 = sand.u32 %s171, 1
        %s572 = scalar_lea.sflag [#allocation4], %s571
        %s573 = sand.u32 %s171, 1
        %s574 = smul.addr %s573, 8
        %s575 = scalar_lea.vmem [#allocation10], %s574
        // Predicated region
        $region61: #{_mpnn_update_packed.1} parent=43 // pred_check
          %p576 = pneg %p181
        $region62: #{_mpnn_update_packed.1} parent=43 // pred_check_branch
          %578 = sbr.rel (%p576) target = $region64
        $region63: #{_mpnn_update_packed.1} parent=43 // pred_region
          %580 = vsyncadd %s572, 0
          %s581 = smul.addr %s27, 8
          %s582 = scalar_lea.hbm %s6, %s581
          %s584 = sshll.u32 %s575, 4
          %s585 = int_to_ptr.vmem [resolvable:$true] %s584
          %s586 = sshll.u32 %s582, 4
          %s587 = int_to_ptr.hbm [resolvable:$true] %s586
          %589 = dma.vmem_to_hbm [thread:$0]  %s585, 128, %s587, %s572
        $region64: #{_mpnn_update_packed.1} parent=43 // pred_fallthru
          _
      $region44: #{_mpnn_update_packed.1} parent=5 // pred_fallthru
        _
      %p590 = scmp.le.s32.totalorder 2, %s22
      // Predicated region
      $region65: #{_mpnn_update_packed.1} parent=5 // pred_check
        %p591 = pneg %p590
      $region66: #{_mpnn_update_packed.1} parent=5 // pred_check_branch
        %593 = sbr.rel (%p591) target = $region68
      $region67: #{_mpnn_update_packed.1} parent=5 // pred_region
        %s594 = ssub.s32 %s22, 2
        // Predicated region
        $region69: #{_mpnn_update_packed.1} parent=67 // pred_check
          %p595 = pneg %p187
        $region70: #{_mpnn_update_packed.1} parent=67 // pred_check_branch
          %597 = sbr.rel (%p595) target = $region72
        $region71: #{_mpnn_update_packed.1} parent=67 // pred_region
          %s598 = sand.u32 %s172, 1
          %s599 = scalar_lea.sflag [#allocation4], %s598
          %s600 = sand.u32 %s172, 1
          %s601 = smul.addr %s600, 8
          %s602 = scalar_lea.vmem [#allocation10], %s601
          %604 = dma.done %s599, 128
        $region72: #{_mpnn_update_packed.1} parent=67 // pred_fallthru
          _
      $region68: #{_mpnn_update_packed.1} parent=5 // pred_fallthru
        _
    $region6: #{_mpnn_update_packed.1} parent=1 // loop_footer
      %s26 = sadd.s32 1, %s22
    $region7: #{_mpnn_update_packed.1} parent=1 // loop_footer_branch
      %21 = sbr.rel target = $region3
    $region8: #{_mpnn_update_packed.1} parent=1 // loop_exit
      _
    %605 = vsyncpa [#allocation3], 1
    %s606 = scalar_lea.sflag [#allocation3], 1
    %607 = vsyncpa %s606, 1
    %608 = vsyncpa [#allocation6], 1
    %s609 = scalar_lea.sflag [#allocation6], 1
    %610 = vsyncpa %s609, 1
    %611 = vsyncpa [#allocation9], 1
    %612 = vsyncpa [#allocation4], 1
    %s613 = scalar_lea.sflag [#allocation4], 1
    %614 = vsyncpa %s613, 1

</llo_original>
